<compile_context>
chip_gen: v5e
topology: v5e:2x2
jax: 0.10.0
libtpu: 0.0.40
codegen_flags: <defaults>
</compile_context>

<pallas_src>
import math

import jax
import jax.numpy as jnp
from jax import lax
from jax.experimental import pallas as pl
from jax.experimental.pallas import tpu as pltpu

D_MODEL = 768   # hardcoded in the PyTorch module (mean_pooling / nn.Linear(768, 512))
D_OUT = 512


def _vmem_limit_bytes():
    cap = 128 << 20                      # v5e / v6e physical VMEM
    try:
        info = pltpu.get_tpu_info()      # 64 MiB on v7x
        cap = int(getattr(info, "vmem_capacity_bytes", cap))
    except Exception:
        pass
    return min(64 << 20, cap // 2)       # ~50% of physical, never above 64 MiB


VMEM_LIMIT_BYTES = _vmem_limit_bytes()


# ---------------------------------------------------------------------------
# Kernel 1: fused (stand-in) embedding lookup + SBERT masked mean pooling.
#   ids (M, L) int32, mask (M, L) int32, table (V, D) bf16  ->  (M, D) f32
# Because the stand-in backbone is a linear embedding lookup, the gather and
# the masked sum over L commute:
#   sum_l mask[m,l] * table[ids[m,l]]  ==  counts[m,:] @ table
# with counts[m,v] = sum_l mask[m,l] * [ids[m,l] == v].  One small MXU matmul
# per tile, no (M, L, 768) intermediate ever written to HBM.
# ---------------------------------------------------------------------------
def fused_embed_meanpool_kernel(ids_ref, mask_ref, tab_ref, out_ref):
    ids = ids_ref[...]                                     # (TM, L) int32
    mask = mask_ref[...].astype(jnp.float32)               # (TM, L) int -> f32 in-kernel
    tm, L = ids.shape
    V = tab_ref.shape[0]

    vocab_iota = lax.broadcasted_iota(jnp.int32, (tm, L, V), 2)
    masked_onehot = jnp.where(ids[:, :, None] == vocab_iota, mask[:, :, None], 0.0)
    counts = jnp.sum(masked_onehot, axis=1)                # (TM, V) f32, small integers

    sum_emb = jnp.dot(counts.astype(jnp.bfloat16), tab_ref[...],
                      preferred_element_type=jnp.float32)  # (TM, D) f32 accumulate
    sum_mask = jnp.maximum(jnp.sum(mask, axis=1, keepdims=True), 1e-9)  # clamp(min=1e-9)
    out_ref[...] = sum_emb * pl.reciprocal(sum_mask, approx=True)


def embed_mean_pool(flat_ids, flat_mask, tok_emb):
    M, L = flat_ids.shape
    V, D = tok_emb.shape
    # Row tile: keep double-buffered (ids+mask+out) blocks <= ~4 MiB and the
    # (tm, L, V) one-hot intermediate <= ~4 MiB.
    io_row = L * 8 + D * 4
    tmp_row = L * V * 4
    tm = min(512, (4 << 20) // (2 * io_row), max(8, (4 << 20) // tmp_row))
    tm = max(8, (tm // 8) * 8)                             # sublane-aligned block rows
    if M <= tm:
        tm = M                                             # full-dim block (no (8,) constraint)

    return pl.pallas_call(
        fused_embed_meanpool_kernel,
        out_shape=jax.ShapeDtypeStruct((M, D), jnp.float32),
        grid=(pl.cdiv(M, tm),),                            # no padding; edge block is masked
        in_specs=[
            pl.BlockSpec((tm, L), lambda i: (i, 0)),
            pl.BlockSpec((tm, L), lambda i: (i, 0)),
            pl.BlockSpec((V, D), lambda i: (0, 0)),        # embedding table resident in VMEM
        ],
        out_specs=pl.BlockSpec((tm, D), lambda i: (i, 0)),
        compiler_params=pltpu.CompilerParams(
            dimension_semantics=("parallel",),
            vmem_limit_bytes=VMEM_LIMIT_BYTES),
    )(flat_ids, flat_mask, tok_emb)


# ---------------------------------------------------------------------------
# Kernel 2: fused SelfAttention(k=q=v) + max-pool over episodes + Linear,
# batched over TB episodes per grid step.
#   x (TB, E, D) bf16: scores = x @ x^T / sqrt(D); softmax (f32); attn = p @ x;
#   pooled = max over E -> (TB, D); out = pooled @ W + b -> (TB, 512) f32
# All matmuls bf16 on the MXU with f32 accumulation; softmax math in f32.
# ---------------------------------------------------------------------------
def attn_maxpool_linear_kernel(x_ref, w_ref, b_ref, out_ref):
    x = x_ref[...]                                         # (TB, E, D) bf16
    d_k = x.shape[-1]
    # scores[b,e,f] = sum_d x[b,e,d] * x[b,f,d]  (no explicit transpose)
    scores = lax.dot_general(
        x, x, (((2,), (2,)), ((0,), (0,))),
        preferred_element_type=jnp.float32) * jnp.float32(1.0 / math.sqrt(d_k))
    m = jnp.max(scores, axis=-1, keepdims=True)
    e = jnp.exp(scores - m)
    p = e * pl.reciprocal(jnp.sum(e, axis=-1, keepdims=True), approx=True)
    # attn[b,e,d] = sum_f p[b,e,f] * x[b,f,d]
    attn = lax.dot_general(
        p.astype(jnp.bfloat16), x, (((2,), (1,)), ((0,), (0,))),
        preferred_element_type=jnp.float32)                # (TB, E, D) f32
    pooled = jnp.max(attn, axis=1)                         # (TB, D) max over episodes
    out_ref[...] = (
        jnp.dot(pooled.astype(jnp.bfloat16), w_ref[...],
                preferred_element_type=jnp.float32)
        + b_ref[...])


def attention_max_linear(x_bf16, w, b):
    Bn, E, D = x_bf16.shape
    # Up to 256 episodes per step (fills the 256-row v6e/v7x MXU); budget the
    # double-buffered bf16 x block against ~1/5 of the VMEM limit.
    tb_budget = max(8, (VMEM_LIMIT_BYTES // 5) // (E * D * 2))
    TB = max(8, (min(256, tb_budget) // 8) * 8)
    if Bn <= TB:
        TB = Bn                                            # single full-dim block

    return pl.pallas_call(
        attn_maxpool_linear_kernel,
        out_shape=jax.ShapeDtypeStruct((Bn, D_OUT), jnp.float32),
        grid=(pl.cdiv(Bn, TB),),                           # no padding; edge block masked
        in_specs=[
            pl.BlockSpec((TB, E, D), lambda i: (i, 0, 0)),
            pl.BlockSpec((D, D_OUT), lambda i: (0, 0)),    # bf16 weight resident across steps
            pl.BlockSpec((1, D_OUT), lambda i: (0, 0)),
        ],
        out_specs=pl.BlockSpec((TB, D_OUT), lambda i: (i, 0)),
        compiler_params=pltpu.CompilerParams(
            dimension_semantics=("parallel",),
            vmem_limit_bytes=VMEM_LIMIT_BYTES),
    )(x_bf16, w, b)


# ---------------------------------------------------------------------------
# Full forward (mirrors Transformer.get_author_embedding)
# ---------------------------------------------------------------------------
def transformer_forward(params, input_ids, attention_mask):
    B, N, E, L = input_ids.shape
    flat_ids = input_ids.reshape(B * N * E, L)             # 'b n e l -> (b n e) l'
    flat_mask = attention_mask.reshape(B * N * E, L)

    # TODO(synk): the pretrained 'paraphrase-distilroberta-base-v1' backbone
    # (AutoModel.from_pretrained) is an external checkpoint with no
    # self-contained Pallas equivalent; a deterministic bf16 token-embedding
    # table stands in for its last_hidden_state.  The lookup is fused into the
    # mean-pool kernel so the (M, L, 768) hidden states never touch HBM.
    comment_embedding = embed_mean_pool(
        flat_ids, flat_mask, params["tok_emb"])            # (M, 768) f32
    comment_embedding = comment_embedding.reshape(B * N, E, D_MODEL)

    episode_embedding = attention_max_linear(
        comment_embedding.astype(jnp.bfloat16),            # bf16 feed (half DMA / VMEM)
        params["w"], params["b"])                          # (B*N, 512) f32

    return {
        "episode_embedding": episode_embedding,
        "comment_embedding": comment_embedding,
    }


# ---------------------------------------------------------------------------
# Pure-JAX reference (f32) for a correctness sanity check
# ---------------------------------------------------------------------------
def reference_forward(params, input_ids, attention_mask):
    B, N, E, L = input_ids.shape
    fid = input_ids.reshape(-1, L)
    fm = attention_mask.reshape(-1, L).astype(jnp.float32)
    tab = params["tok_emb"].astype(jnp.float32)
    emb = tab[fid]                                         # (M, L, D)
    sum_emb = jnp.sum(emb * fm[:, :, None], axis=1)
    sum_mask = jnp.maximum(jnp.sum(fm, axis=1, keepdims=True), 1e-9)
    ce = (sum_emb / sum_mask).reshape(B * N, E, D_MODEL)
    scores = jnp.einsum("bed,bfd->bef", ce, ce) / math.sqrt(D_MODEL)
    p = jax.nn.softmax(scores, axis=-1)
    attn = jnp.einsum("bef,bfd->bed", p, ce)
    pooled = jnp.max(attn, axis=1)
    ep = pooled @ params["w"].astype(jnp.float32) + params["b"]
    return ce, ep


if __name__ == "__main__":
    import numpy as np

    B, N, E, L = 2, 1, 8, 16
    VOCAB = 64

    key = jax.random.PRNGKey(0)
    k_emb, k_w, k_b, k_ids = jax.random.split(key, 4)

    params = {
        # stand-in backbone embedding table (deterministic), stored bf16
        "tok_emb": (0.02 * jax.random.normal(
            k_emb, (VOCAB, D_MODEL), jnp.float32)).astype(jnp.bfloat16),
        # nn.Linear(768, 512): stored already transposed as (768, 512), bf16
        "w": (jax.random.normal(k_w, (D_MODEL, D_OUT), jnp.float32)
              / math.sqrt(D_MODEL)).astype(jnp.bfloat16),
        "b": 0.01 * jax.random.normal(k_b, (1, D_OUT), jnp.float32),
    }

    input_ids = jax.random.randint(k_ids, (B, N, E, L), 0, VOCAB, dtype=jnp.int32)
    # deterministic padding mask: first 12 tokens valid, last 4 padded
    attention_mask = jnp.broadcast_to(
        (jnp.arange(L) < 12).astype(jnp.int32), (B, N, E, L))

    fwd = jax.jit(lambda ids, m: transformer_forward(params, ids, m))
    out = fwd(input_ids, attention_mask)
    jax.block_until_ready(out)

    assert out["episode_embedding"].shape == (B * N, D_OUT)
    assert out["comment_embedding"].shape == (B * N, E, D_MODEL)

    ref_ce, ref_ep = reference_forward(params, input_ids, attention_mask)
    np.testing.assert_allclose(np.asarray(out["comment_embedding"]),
                               np.asarray(ref_ce), rtol=5e-2, atol=1e-2)
    np.testing.assert_allclose(np.asarray(out["episode_embedding"]),
                               np.asarray(ref_ep), rtol=5e-2, atol=1e-2)

    print("KERNEL_OK")
</pallas_src>

<mosaic_0001>
module attributes {stable_mosaic.version = 11 : i64} {
  func.func @fused_embed_meanpool_kernel(%arg0: i32, %arg1: memref<16x16xi32, #tpu.memory_space<vmem>>, %arg2: memref<16x16xi32, #tpu.memory_space<vmem>>, %arg3: memref<64x768xbf16, #tpu.memory_space<vmem>>, %arg4: memref<16x768xf32, #tpu.memory_space<vmem>>) attributes {dimension_semantics = [#tpu.dimension_semantics<parallel>], iteration_bounds = array<i64: 1>, scalar_prefetch = 0 : i64, scratch_operands = 0 : i64, tpu.core_type = #tpu.core_type<tc>, window_params = [{transform_indices = @transform_0, window_bounds = array<i64: 16, 16>}, {transform_indices = @transform_1, window_bounds = array<i64: 16, 16>}, {pipeline_mode = #tpu.pipeline_mode<synchronous>, transform_indices = @transform_2, window_bounds = array<i64: 64, 768>}, {transform_indices = @transform_3, window_bounds = array<i64: 16, 768>}]} {
    %c0 = arith.constant 0 : index
    %c0_0 = arith.constant 0 : index
    %0 = vector.load %arg1[%c0, %c0_0] : memref<16x16xi32, #tpu.memory_space<vmem>>, vector<16x16xi32>
    %c0_1 = arith.constant 0 : index
    %c0_2 = arith.constant 0 : index
    %1 = vector.load %arg2[%c0_1, %c0_2] : memref<16x16xi32, #tpu.memory_space<vmem>>, vector<16x16xi32>
    %2 = arith.sitofp %1 : vector<16x16xi32> to vector<16x16xf32>
    %3 = tpu.iota {dimensions = array<i32: 2>} : vector<16x16x64xi32>
    %4 = vector.shape_cast %0 : vector<16x16xi32> to vector<16x16x1xi32>
    %5 = vector.broadcast %4 : vector<16x16x1xi32> to vector<16x16x64xi32>
    %6 = arith.cmpi eq, %5, %3 : vector<16x16x64xi32>
    %7 = vector.shape_cast %2 : vector<16x16xf32> to vector<16x16x1xf32>
    %cst = arith.constant 0.000000e+00 : f32
    %8 = vector.shape_cast %7 : vector<16x16x1xf32> to vector<16x16x1xf32>
    %9 = vector.broadcast %8 : vector<16x16x1xf32> to vector<16x16x64xf32>
    %10 = vector.broadcast %cst : f32 to vector<16x16x64xf32>
    %11 = arith.select %6, %9, %10 : vector<16x16x64xi1>, vector<16x16x64xf32>
    %cst_3 = arith.constant dense<0.000000e+00> : vector<16x64xf32>
    %12 = vector.multi_reduction <add>, %11, %cst_3 [1] : vector<16x16x64xf32> to vector<16x64xf32>
    %13 = arith.truncf %12 : vector<16x64xf32> to vector<16x64xbf16>
    %c0_4 = arith.constant 0 : index
    %c0_5 = arith.constant 0 : index
    %14 = vector.load %arg3[%c0_4, %c0_5] : memref<64x768xbf16, #tpu.memory_space<vmem>>, vector<64x768xbf16>
    %cst_6 = arith.constant dense<0.000000e+00> : vector<16x768xf32>
    %15 = tpu.matmul %13, %14, %cst_6 {dimension_numbers = #tpu.dot_dimension_numbers<[1], [0], [0], [1], [0, 0, 1, 1], [], []>} : vector<16x64xbf16>, vector<64x768xbf16>, vector<16x768xf32> -> vector<16x768xf32>
    %cst_7 = arith.constant dense<0.000000e+00> : vector<16xf32>
    %16 = vector.multi_reduction <add>, %2, %cst_7 [1] : vector<16x16xf32> to vector<16xf32>
    %17 = vector.shape_cast %16 : vector<16xf32> to vector<16x1xf32>
    %cst_8 = arith.constant 9.99999971E-10 : f32
    %18 = vector.broadcast %cst_8 : f32 to vector<16x1xf32>
    %19 = arith.maximumf %17, %18 : vector<16x1xf32>
    %20 = tpu.reciprocal %19 {approx = true} : vector<16x1xf32> -> vector<16x1xf32>
    %21 = vector.broadcast %20 : vector<16x1xf32> to vector<16x768xf32>
    %22 = arith.mulf %15, %21 : vector<16x768xf32>
    %c0_9 = arith.constant 0 : index
    %c0_10 = arith.constant 0 : index
    %23 = vector.load %arg4[%c0_9, %c0_10] : memref<16x768xf32, #tpu.memory_space<vmem>>, vector<16x768xf32>
    tpu.vector_store %arg4[%c0_9, %c0_10], %22 {strides = array<i32>} : memref<16x768xf32, #tpu.memory_space<vmem>>, vector<16x768xf32>,
    return
  }
  func.func @transform_0(%arg0: i32) -> (i32, i32) {
    %c0_i32 = arith.constant 0 : i32
    %c0_i32_0 = arith.constant 0 : i32
    return %arg0, %c0_i32 : i32, i32
  }
  func.func @transform_1(%arg0: i32) -> (i32, i32) {
    %c0_i32 = arith.constant 0 : i32
    %c0_i32_0 = arith.constant 0 : i32
    return %arg0, %c0_i32 : i32, i32
  }
  func.func @transform_2(%arg0: i32) -> (i32, i32) {
    %c0_i32 = arith.constant 0 : i32
    %c0_i32_0 = arith.constant 0 : i32
    %c0_i32_1 = arith.constant 0 : i32
    return %c0_i32, %c0_i32_0 : i32, i32
  }
  func.func @transform_3(%arg0: i32) -> (i32, i32) {
    %c0_i32 = arith.constant 0 : i32
    %c0_i32_0 = arith.constant 0 : i32
    return %arg0, %c0_i32 : i32, i32
  }
}

module attributes {stable_mosaic.version = 11 : i64} {
  func.func @attn_maxpool_linear_kernel(%arg0: i32, %arg1: memref<2x8x768xbf16, #tpu.memory_space<vmem>>, %arg2: memref<768x512xbf16, #tpu.memory_space<vmem>>, %arg3: memref<1x512xf32, #tpu.memory_space<vmem>>, %arg4: memref<2x512xf32, #tpu.memory_space<vmem>>) attributes {dimension_semantics = [#tpu.dimension_semantics<parallel>], iteration_bounds = array<i64: 1>, scalar_prefetch = 0 : i64, scratch_operands = 0 : i64, tpu.core_type = #tpu.core_type<tc>, window_params = [{transform_indices = @transform_0, window_bounds = array<i64: 2, 8, 768>}, {pipeline_mode = #tpu.pipeline_mode<synchronous>, transform_indices = @transform_1, window_bounds = array<i64: 768, 512>}, {pipeline_mode = #tpu.pipeline_mode<synchronous>, transform_indices = @transform_2, window_bounds = array<i64: 1, 512>}, {transform_indices = @transform_3, window_bounds = array<i64: 2, 512>}]} {
    %c0 = arith.constant 0 : index
    %c0_0 = arith.constant 0 : index
    %c0_1 = arith.constant 0 : index
    %0 = vector.load %arg1[%c0, %c0_0, %c0_1] : memref<2x8x768xbf16, #tpu.memory_space<vmem>>, vector<2x8x768xbf16>
    %cst = arith.constant dense<0.000000e+00> : vector<2x8x8xf32>
    %1 = tpu.matmul %0, %0, %cst {dimension_numbers = #tpu.dot_dimension_numbers<[2], [2], [1], [1], [0, 0, 0, 1, 1, 1], [0], [0]>} : vector<2x8x768xbf16>, vector<2x8x768xbf16>, vector<2x8x8xf32> -> vector<2x8x8xf32>
    %cst_2 = arith.constant 0.0360843912 : f32
    %2 = vector.broadcast %cst_2 : f32 to vector<2x8x8xf32>
    %3 = arith.mulf %1, %2 : vector<2x8x8xf32>
    %cst_3 = arith.constant dense<0xFF800000> : vector<2x8xf32>
    %4 = vector.multi_reduction <maximumf>, %3, %cst_3 [2] : vector<2x8x8xf32> to vector<2x8xf32>
    %5 = vector.shape_cast %4 : vector<2x8xf32> to vector<2x8x1xf32>
    %6 = vector.broadcast %5 : vector<2x8x1xf32> to vector<2x8x8xf32>
    %7 = arith.subf %3, %6 : vector<2x8x8xf32>
    %8 = math.exp %7 : vector<2x8x8xf32>
    %cst_4 = arith.constant dense<0.000000e+00> : vector<2x8xf32>
    %9 = vector.multi_reduction <add>, %8, %cst_4 [2] : vector<2x8x8xf32> to vector<2x8xf32>
    %10 = vector.shape_cast %9 : vector<2x8xf32> to vector<2x8x1xf32>
    %11 = tpu.reciprocal %10 {approx = true} : vector<2x8x1xf32> -> vector<2x8x1xf32>
    %12 = vector.broadcast %11 : vector<2x8x1xf32> to vector<2x8x8xf32>
    %13 = arith.mulf %8, %12 : vector<2x8x8xf32>
    %14 = arith.truncf %13 : vector<2x8x8xf32> to vector<2x8x8xbf16>
    %cst_5 = arith.constant dense<0.000000e+00> : vector<2x8x768xf32>
    %15 = tpu.matmul %14, %0, %cst_5 {dimension_numbers = #tpu.dot_dimension_numbers<[2], [1], [1], [2], [0, 0, 0, 1, 1, 2], [0], [0]>} : vector<2x8x8xbf16>, vector<2x8x768xbf16>, vector<2x8x768xf32> -> vector<2x8x768xf32>
    %cst_6 = arith.constant dense<0xFF800000> : vector<2x768xf32>
    %16 = vector.multi_reduction <maximumf>, %15, %cst_6 [1] : vector<2x8x768xf32> to vector<2x768xf32>
    %17 = arith.truncf %16 : vector<2x768xf32> to vector<2x768xbf16>
    %c0_7 = arith.constant 0 : index
    %c0_8 = arith.constant 0 : index
    %18 = vector.load %arg2[%c0_7, %c0_8] : memref<768x512xbf16, #tpu.memory_space<vmem>>, vector<768x512xbf16>
    %cst_9 = arith.constant dense<0.000000e+00> : vector<2x512xf32>
    %19 = tpu.matmul %17, %18, %cst_9 {dimension_numbers = #tpu.dot_dimension_numbers<[1], [0], [0], [1], [0, 0, 1, 1], [], []>} : vector<2x768xbf16>, vector<768x512xbf16>, vector<2x512xf32> -> vector<2x512xf32>
    %c0_10 = arith.constant 0 : index
    %c0_11 = arith.constant 0 : index
    %20 = vector.load %arg3[%c0_10, %c0_11] : memref<1x512xf32, #tpu.memory_space<vmem>>, vector<1x512xf32>
    %21 = vector.broadcast %20 : vector<1x512xf32> to vector<2x512xf32>
    %22 = arith.addf %19, %21 : vector<2x512xf32>
    %c0_12 = arith.constant 0 : index
    %c0_13 = arith.constant 0 : index
    %23 = vector.load %arg4[%c0_12, %c0_13] : memref<2x512xf32, #tpu.memory_space<vmem>>, vector<2x512xf32>
    tpu.vector_store %arg4[%c0_12, %c0_13], %22 {strides = array<i32>} : memref<2x512xf32, #tpu.memory_space<vmem>>, vector<2x512xf32>,
    return
  }
  func.func @transform_0(%arg0: i32) -> (i32, i32, i32) {
    %c0_i32 = arith.constant 0 : i32
    %c0_i32_0 = arith.constant 0 : i32
    %c0_i32_1 = arith.constant 0 : i32
    return %arg0, %c0_i32, %c0_i32_0 : i32, i32, i32
  }
  func.func @transform_1(%arg0: i32) -> (i32, i32) {
    %c0_i32 = arith.constant 0 : i32
    %c0_i32_0 = arith.constant 0 : i32
    %c0_i32_1 = arith.constant 0 : i32
    return %c0_i32, %c0_i32_0 : i32, i32
  }
  func.func @transform_2(%arg0: i32) -> (i32, i32) {
    %c0_i32 = arith.constant 0 : i32
    %c0_i32_0 = arith.constant 0 : i32
    %c0_i32_1 = arith.constant 0 : i32
    return %c0_i32, %c0_i32_0 : i32, i32
  }
  func.func @transform_3(%arg0: i32) -> (i32, i32) {
    %c0_i32 = arith.constant 0 : i32
    %c0_i32_0 = arith.constant 0 : i32
    return %arg0, %c0_i32 : i32, i32
  }
}

</mosaic_0001>

<llo_original>
// kernel: _lambda_.2
$region0: #{_lambda_.2}
  #allocation0 [shape = 'u32[]', space=smem, size = 0x4, offset = 0x4, fixed_abs, tag = 'smem constant byte address 0x4 - core index']
  #allocation1 [shape = 'u32[72,128]{1,0:T(1,128)}', space=vmem, size = 0x9000, scoped, tag = 'internal scratch']
  %s0 = inlined_call_operand.hbm [shape: s32[16,16], index: 0, kind: input, shape index: {}]
  %s1 = inlined_call_operand.hbm [shape: s32[16,16], index: 1, kind: input, shape index: {}]
  %s2 = inlined_call_operand.hbm [shape: bf16[64,768], index: 2, kind: input, shape index: {}]
  %s3 = inlined_call_operand.vmem [shape: f32[16,768], index: 3, kind: output, shape index: {}]
  %s4 = sld [smem:[#allocation0]]
  $region34: #{_lambda_.2} parent=0
    _
  %s6 = ssub.s32 1, %s4
  %s7 = scalar_select 0, %s6, %s4
  $region1: #{_lambda_.2} parent=0
    #allocation2 [shape = 'u8[8192]{0}', space=vmem, size = 0x2000, scoped, tag = 'input window, operand 0, single buffered']
    #allocation3 [shape = 's32[1]{0}', space=sflag, size = 0x4, scoped, tag = 'scoped memory for _lambda_.2']
    #allocation4 [shape = 'u8[8192]{0}', space=vmem, size = 0x2000, scoped, tag = 'input window, operand 1, single buffered']
    #allocation5 [shape = 's32[1]{0}', space=sflag, size = 0x4, scoped, tag = 'scoped memory for _lambda_.2']
    #allocation6 [shape = 'u8[98304]{0}', space=vmem, size = 0x18000, scoped, tag = 'input window, operand 2, single buffered']
    %8 = vsyncpa [#allocation3], 0
    %9 = vsyncpa [#allocation5], 0
    // Predicated region
    $region2: #{_lambda_.2} parent=1 // pred_check
      _
    $region3: #{_lambda_.2} parent=1 // pred_check_branch
      %11 = sbr.rel (0) target = $region5
    $region4: #{_lambda_.2} parent=1 // pred_region
      %13 = vsyncadd [#allocation3], 0
      %s14 = sshll.u32 %s0, 4
      %s15 = int_to_ptr.hbm [resolvable:$true] %s14
      %s16 = sshll.u32 [#allocation2], 4
      %s17 = int_to_ptr.vmem [resolvable:$true] %s16
      %22 = dma.hbm_to_vmem [thread:$0]  %s15, 256, %s17, [#allocation3], 128, 128, 8
    $region5: #{_lambda_.2} parent=1 // pred_fallthru
      _
    // Predicated region
    $region6: #{_lambda_.2} parent=1 // pred_check
      _
    $region7: #{_lambda_.2} parent=1 // pred_check_branch
      %24 = sbr.rel (0) target = $region9
    $region8: #{_lambda_.2} parent=1 // pred_region
      %26 = vsyncadd [#allocation5], 0
      %s27 = sshll.u32 %s1, 4
      %s28 = int_to_ptr.hbm [resolvable:$true] %s27
      %s29 = sshll.u32 [#allocation4], 4
      %s30 = int_to_ptr.vmem [resolvable:$true] %s29
      %35 = dma.hbm_to_vmem [thread:$0]  %s28, 256, %s30, [#allocation5], 128, 128, 8
    $region9: #{_lambda_.2} parent=1 // pred_fallthru
      _
    // Predicated region
    $region10: #{_lambda_.2} parent=1 // pred_check
      _
    $region11: #{_lambda_.2} parent=1 // pred_check_branch
      %37 = sbr.rel (0) target = $region13
    $region12: #{_lambda_.2} parent=1 // pred_region
      %39 = vsyncadd [#allocation5], 0
      %s40 = sshll.u32 %s2, 4
      %s41 = int_to_ptr.hbm [resolvable:$true] %s40
      %s42 = sshll.u32 [#allocation6], 4
      %s43 = int_to_ptr.vmem [resolvable:$true] %s42
      %48 = dma.hbm_to_vmem [thread:$0]  %s41, 3072, %s43, [#allocation5], 384, 384, 24
    $region13: #{_lambda_.2} parent=1 // pred_fallthru
      _
    // Predicated region
    $region14: #{_lambda_.2} parent=1 // pred_check
      _
    $region15: #{_lambda_.2} parent=1 // pred_check_branch
      %50 = sbr.rel (0) target = $region17
    $region16: #{_lambda_.2} parent=1 // pred_region
      %52 = dma.done [#allocation3], 256
    $region17: #{_lambda_.2} parent=1 // pred_fallthru
      _
    // Predicated region
    $region18: #{_lambda_.2} parent=1 // pred_check
      _
    $region19: #{_lambda_.2} parent=1 // pred_check_branch
      %54 = sbr.rel (0) target = $region21
    $region20: #{_lambda_.2} parent=1 // pred_region
      %56 = dma.done [#allocation5], 256
    $region21: #{_lambda_.2} parent=1 // pred_fallthru
      _
    // Predicated region
    $region22: #{_lambda_.2} parent=1 // pred_check
      _
    $region23: #{_lambda_.2} parent=1 // pred_check_branch
      %58 = sbr.rel (0) target = $region25
    $region24: #{_lambda_.2} parent=1 // pred_region
      %60 = dma.done [#allocation5], 3072
    $region25: #{_lambda_.2} parent=1 // pred_fallthru
      _
    %v62 = vld [vmem:[#allocation2] sm:$0xff]
    %v63 = vld [vmem:[#allocation2 + $0x8] sm:$0xff]
    %v64 = vld [vmem:[#allocation4] sm:$0xff]
    %v65 = vld [vmem:[#allocation4 + $0x8] sm:$0xff]
    %v66 = vcvt.s32.f32 %v64
    %v67 = vcvt.s32.f32 %v65
    %v68 = vlaneseq
    %v69 = vand.u32 %v68, 127
    %v70 = vperm.slane %v62, 0
    %v71 = vlaneseq
    %v72 = vshrl.u32 %v71, 7
    %74 = vset.pattern.permute.xlu0 %v72
    %75 = vperm.xlu0 %74, %v70
    %v76 = vpop.permute.xlu0 %75
    %v77 = vlaneseq
    %v78 = vshrl.u32 %v77, 7
    %v79 = vadd.s32 %v78, 8
    %80 = vset.pattern.permute.xlu0 %v79
    %81 = vperm.xlu0 %80, %v70
    %v82 = vpop.permute.xlu0 %81
    %v83 = vperm.slane %v62, 1
    %v84 = vlaneseq
    %v85 = vshrl.u32 %v84, 7
    %87 = vset.pattern.permute.xlu0 %v85
    %88 = vperm.xlu0 %87, %v83
    %v89 = vpop.permute.xlu0 %88
    %v90 = vlaneseq
    %v91 = vshrl.u32 %v90, 7
    %v92 = vadd.s32 %v91, 8
    %93 = vset.pattern.permute.xlu0 %v92
    %94 = vperm.xlu0 %93, %v83
    %v95 = vpop.permute.xlu0 %94
    %v96 = vperm.slane %v62, 2
    %v97 = vlaneseq
    %v98 = vshrl.u32 %v97, 7
    %100 = vset.pattern.permute.xlu0 %v98
    %101 = vperm.xlu0 %100, %v96
    %v102 = vpop.permute.xlu0 %101
    %v103 = vlaneseq
    %v104 = vshrl.u32 %v103, 7
    %v105 = vadd.s32 %v104, 8
    %106 = vset.pattern.permute.xlu0 %v105
    %107 = vperm.xlu0 %106, %v96
    %v108 = vpop.permute.xlu0 %107
    %v109 = vperm.slane %v62, 3
    %v110 = vlaneseq
    %v111 = vshrl.u32 %v110, 7
    %113 = vset.pattern.permute.xlu0 %v111
    %114 = vperm.xlu0 %113, %v109
    %v115 = vpop.permute.xlu0 %114
    %v116 = vlaneseq
    %v117 = vshrl.u32 %v116, 7
    %v118 = vadd.s32 %v117, 8
    %119 = vset.pattern.permute.xlu0 %v118
    %120 = vperm.xlu0 %119, %v109
    %v121 = vpop.permute.xlu0 %120
    %v122 = vperm.slane %v62, 4
    %v123 = vlaneseq
    %v124 = vshrl.u32 %v123, 7
    %126 = vset.pattern.permute.xlu0 %v124
    %127 = vperm.xlu0 %126, %v122
    %v128 = vpop.permute.xlu0 %127
    %v129 = vlaneseq
    %v130 = vshrl.u32 %v129, 7
    %v131 = vadd.s32 %v130, 8
    %132 = vset.pattern.permute.xlu0 %v131
    %133 = vperm.xlu0 %132, %v122
    %v134 = vpop.permute.xlu0 %133
    %v135 = vperm.slane %v62, 5
    %v136 = vlaneseq
    %v137 = vshrl.u32 %v136, 7
    %139 = vset.pattern.permute.xlu0 %v137
    %140 = vperm.xlu0 %139, %v135
    %v141 = vpop.permute.xlu0 %140
    %v142 = vlaneseq
    %v143 = vshrl.u32 %v142, 7
    %v144 = vadd.s32 %v143, 8
    %145 = vset.pattern.permute.xlu0 %v144
    %146 = vperm.xlu0 %145, %v135
    %v147 = vpop.permute.xlu0 %146
    %v148 = vperm.slane %v62, 6
    %v149 = vlaneseq
    %v150 = vshrl.u32 %v149, 7
    %152 = vset.pattern.permute.xlu0 %v150
    %153 = vperm.xlu0 %152, %v148
    %v154 = vpop.permute.xlu0 %153
    %v155 = vlaneseq
    %v156 = vshrl.u32 %v155, 7
    %v157 = vadd.s32 %v156, 8
    %158 = vset.pattern.permute.xlu0 %v157
    %159 = vperm.xlu0 %158, %v148
    %v160 = vpop.permute.xlu0 %159
    %v161 = vperm.slane %v62, 7
    %v162 = vlaneseq
    %v163 = vshrl.u32 %v162, 7
    %165 = vset.pattern.permute.xlu0 %v163
    %166 = vperm.xlu0 %165, %v161
    %v167 = vpop.permute.xlu0 %166
    %v168 = vlaneseq
    %v169 = vshrl.u32 %v168, 7
    %v170 = vadd.s32 %v169, 8
    %171 = vset.pattern.permute.xlu0 %v170
    %172 = vperm.xlu0 %171, %v161
    %v173 = vpop.permute.xlu0 %172
    %v174 = vperm.slane %v63, 0
    %v175 = vlaneseq
    %v176 = vshrl.u32 %v175, 7
    %178 = vset.pattern.permute.xlu0 %v176
    %179 = vperm.xlu0 %178, %v174
    %v180 = vpop.permute.xlu0 %179
    %v181 = vlaneseq
    %v182 = vshrl.u32 %v181, 7
    %v183 = vadd.s32 %v182, 8
    %184 = vset.pattern.permute.xlu0 %v183
    %185 = vperm.xlu0 %184, %v174
    %v186 = vpop.permute.xlu0 %185
    %v187 = vperm.slane %v63, 1
    %v188 = vlaneseq
    %v189 = vshrl.u32 %v188, 7
    %191 = vset.pattern.permute.xlu0 %v189
    %192 = vperm.xlu0 %191, %v187
    %v193 = vpop.permute.xlu0 %192
    %v194 = vlaneseq
    %v195 = vshrl.u32 %v194, 7
    %v196 = vadd.s32 %v195, 8
    %197 = vset.pattern.permute.xlu0 %v196
    %198 = vperm.xlu0 %197, %v187
    %v199 = vpop.permute.xlu0 %198
    %v200 = vperm.slane %v63, 2
    %v201 = vlaneseq
    %v202 = vshrl.u32 %v201, 7
    %204 = vset.pattern.permute.xlu0 %v202
    %205 = vperm.xlu0 %204, %v200
    %v206 = vpop.permute.xlu0 %205
    %v207 = vlaneseq
    %v208 = vshrl.u32 %v207, 7
    %v209 = vadd.s32 %v208, 8
    %210 = vset.pattern.permute.xlu0 %v209
    %211 = vperm.xlu0 %210, %v200
    %v212 = vpop.permute.xlu0 %211
    %v213 = vperm.slane %v63, 3
    %v214 = vlaneseq
    %v215 = vshrl.u32 %v214, 7
    %217 = vset.pattern.permute.xlu0 %v215
    %218 = vperm.xlu0 %217, %v213
    %v219 = vpop.permute.xlu0 %218
    %v220 = vlaneseq
    %v221 = vshrl.u32 %v220, 7
    %v222 = vadd.s32 %v221, 8
    %223 = vset.pattern.permute.xlu0 %v222
    %224 = vperm.xlu0 %223, %v213
    %v225 = vpop.permute.xlu0 %224
    %v226 = vperm.slane %v63, 4
    %v227 = vlaneseq
    %v228 = vshrl.u32 %v227, 7
    %230 = vset.pattern.permute.xlu0 %v228
    %231 = vperm.xlu0 %230, %v226
    %v232 = vpop.permute.xlu0 %231
    %v233 = vlaneseq
    %v234 = vshrl.u32 %v233, 7
    %v235 = vadd.s32 %v234, 8
    %236 = vset.pattern.permute.xlu0 %v235
    %237 = vperm.xlu0 %236, %v226
    %v238 = vpop.permute.xlu0 %237
    %v239 = vperm.slane %v63, 5
    %v240 = vlaneseq
    %v241 = vshrl.u32 %v240, 7
    %243 = vset.pattern.permute.xlu0 %v241
    %244 = vperm.xlu0 %243, %v239
    %v245 = vpop.permute.xlu0 %244
    %v246 = vlaneseq
    %v247 = vshrl.u32 %v246, 7
    %v248 = vadd.s32 %v247, 8
    %249 = vset.pattern.permute.xlu0 %v248
    %250 = vperm.xlu0 %249, %v239
    %v251 = vpop.permute.xlu0 %250
    %v252 = vperm.slane %v63, 6
    %v253 = vlaneseq
    %v254 = vshrl.u32 %v253, 7
    %256 = vset.pattern.permute.xlu0 %v254
    %257 = vperm.xlu0 %256, %v252
    %v258 = vpop.permute.xlu0 %257
    %v259 = vlaneseq
    %v260 = vshrl.u32 %v259, 7
    %v261 = vadd.s32 %v260, 8
    %262 = vset.pattern.permute.xlu0 %v261
    %263 = vperm.xlu0 %262, %v252
    %v264 = vpop.permute.xlu0 %263
    %v265 = vperm.slane %v63, 7
    %v266 = vlaneseq
    %v267 = vshrl.u32 %v266, 7
    %269 = vset.pattern.permute.xlu0 %v267
    %270 = vperm.xlu0 %269, %v265
    %v271 = vpop.permute.xlu0 %270
    %v272 = vlaneseq
    %v273 = vshrl.u32 %v272, 7
    %v274 = vadd.s32 %v273, 8
    %275 = vset.pattern.permute.xlu0 %v274
    %276 = vperm.xlu0 %275, %v265
    %v277 = vpop.permute.xlu0 %276
    %vm278 = vcmp.eq.s32.totalorder %v76, %v69
    %vm279 = vcmp.eq.s32.totalorder %v82, %v69
    %vm280 = vcmp.eq.s32.totalorder %v89, %v69
    %vm281 = vcmp.eq.s32.totalorder %v95, %v69
    %vm282 = vcmp.eq.s32.totalorder %v102, %v69
    %vm283 = vcmp.eq.s32.totalorder %v108, %v69
    %vm284 = vcmp.eq.s32.totalorder %v115, %v69
    %vm285 = vcmp.eq.s32.totalorder %v121, %v69
    %vm286 = vcmp.eq.s32.totalorder %v128, %v69
    %vm287 = vcmp.eq.s32.totalorder %v134, %v69
    %vm288 = vcmp.eq.s32.totalorder %v141, %v69
    %vm289 = vcmp.eq.s32.totalorder %v147, %v69
    %vm290 = vcmp.eq.s32.totalorder %v154, %v69
    %vm291 = vcmp.eq.s32.totalorder %v160, %v69
    %vm292 = vcmp.eq.s32.totalorder %v167, %v69
    %vm293 = vcmp.eq.s32.totalorder %v173, %v69
    %vm294 = vcmp.eq.s32.totalorder %v180, %v69
    %vm295 = vcmp.eq.s32.totalorder %v186, %v69
    %vm296 = vcmp.eq.s32.totalorder %v193, %v69
    %vm297 = vcmp.eq.s32.totalorder %v199, %v69
    %vm298 = vcmp.eq.s32.totalorder %v206, %v69
    %vm299 = vcmp.eq.s32.totalorder %v212, %v69
    %vm300 = vcmp.eq.s32.totalorder %v219, %v69
    %vm301 = vcmp.eq.s32.totalorder %v225, %v69
    %vm302 = vcmp.eq.s32.totalorder %v232, %v69
    %vm303 = vcmp.eq.s32.totalorder %v238, %v69
    %vm304 = vcmp.eq.s32.totalorder %v245, %v69
    %vm305 = vcmp.eq.s32.totalorder %v251, %v69
    %vm306 = vcmp.eq.s32.totalorder %v258, %v69
    %vm307 = vcmp.eq.s32.totalorder %v264, %v69
    %vm308 = vcmp.eq.s32.totalorder %v271, %v69
    %vm309 = vcmp.eq.s32.totalorder %v277, %v69
    %v310 = vperm.slane %v66, 0
    %v311 = vlaneseq
    %v312 = vshrl.u32 %v311, 7
    %314 = vset.pattern.permute.xlu0 %v312
    %315 = vperm.xlu0 %314, %v310
    %v316 = vpop.permute.xlu0 %315
    %v317 = vlaneseq
    %v318 = vshrl.u32 %v317, 7
    %v319 = vadd.s32 %v318, 8
    %320 = vset.pattern.permute.xlu0 %v319
    %321 = vperm.xlu0 %320, %v310
    %v322 = vpop.permute.xlu0 %321
    %v323 = vperm.slane %v66, 1
    %v324 = vlaneseq
    %v325 = vshrl.u32 %v324, 7
    %327 = vset.pattern.permute.xlu0 %v325
    %328 = vperm.xlu0 %327, %v323
    %v329 = vpop.permute.xlu0 %328
    %v330 = vlaneseq
    %v331 = vshrl.u32 %v330, 7
    %v332 = vadd.s32 %v331, 8
    %333 = vset.pattern.permute.xlu0 %v332
    %334 = vperm.xlu0 %333, %v323
    %v335 = vpop.permute.xlu0 %334
    %v336 = vperm.slane %v66, 2
    %v337 = vlaneseq
    %v338 = vshrl.u32 %v337, 7
    %340 = vset.pattern.permute.xlu0 %v338
    %341 = vperm.xlu0 %340, %v336
    %v342 = vpop.permute.xlu0 %341
    %v343 = vlaneseq
    %v344 = vshrl.u32 %v343, 7
    %v345 = vadd.s32 %v344, 8
    %346 = vset.pattern.permute.xlu0 %v345
    %347 = vperm.xlu0 %346, %v336
    %v348 = vpop.permute.xlu0 %347
    %v349 = vperm.slane %v66, 3
    %v350 = vlaneseq
    %v351 = vshrl.u32 %v350, 7
    %353 = vset.pattern.permute.xlu0 %v351
    %354 = vperm.xlu0 %353, %v349
    %v355 = vpop.permute.xlu0 %354
    %v356 = vlaneseq
    %v357 = vshrl.u32 %v356, 7
    %v358 = vadd.s32 %v357, 8
    %359 = vset.pattern.permute.xlu0 %v358
    %360 = vperm.xlu0 %359, %v349
    %v361 = vpop.permute.xlu0 %360
    %v362 = vperm.slane %v66, 4
    %v363 = vlaneseq
    %v364 = vshrl.u32 %v363, 7
    %366 = vset.pattern.permute.xlu0 %v364
    %367 = vperm.xlu0 %366, %v362
    %v368 = vpop.permute.xlu0 %367
    %v369 = vlaneseq
    %v370 = vshrl.u32 %v369, 7
    %v371 = vadd.s32 %v370, 8
    %372 = vset.pattern.permute.xlu0 %v371
    %373 = vperm.xlu0 %372, %v362
    %v374 = vpop.permute.xlu0 %373
    %v375 = vperm.slane %v66, 5
    %v376 = vlaneseq
    %v377 = vshrl.u32 %v376, 7
    %379 = vset.pattern.permute.xlu0 %v377
    %380 = vperm.xlu0 %379, %v375
    %v381 = vpop.permute.xlu0 %380
    %v382 = vlaneseq
    %v383 = vshrl.u32 %v382, 7
    %v384 = vadd.s32 %v383, 8
    %385 = vset.pattern.permute.xlu0 %v384
    %386 = vperm.xlu0 %385, %v375
    %v387 = vpop.permute.xlu0 %386
    %v388 = vperm.slane %v66, 6
    %v389 = vlaneseq
    %v390 = vshrl.u32 %v389, 7
    %392 = vset.pattern.permute.xlu0 %v390
    %393 = vperm.xlu0 %392, %v388
    %v394 = vpop.permute.xlu0 %393
    %v395 = vlaneseq
    %v396 = vshrl.u32 %v395, 7
    %v397 = vadd.s32 %v396, 8
    %398 = vset.pattern.permute.xlu0 %v397
    %399 = vperm.xlu0 %398, %v388
    %v400 = vpop.permute.xlu0 %399
    %v401 = vperm.slane %v66, 7
    %v402 = vlaneseq
    %v403 = vshrl.u32 %v402, 7
    %405 = vset.pattern.permute.xlu0 %v403
    %406 = vperm.xlu0 %405, %v401
    %v407 = vpop.permute.xlu0 %406
    %v408 = vlaneseq
    %v409 = vshrl.u32 %v408, 7
    %v410 = vadd.s32 %v409, 8
    %411 = vset.pattern.permute.xlu0 %v410
    %412 = vperm.xlu0 %411, %v401
    %v413 = vpop.permute.xlu0 %412
    %v414 = vperm.slane %v67, 0
    %v415 = vlaneseq
    %v416 = vshrl.u32 %v415, 7
    %418 = vset.pattern.permute.xlu0 %v416
    %419 = vperm.xlu0 %418, %v414
    %v420 = vpop.permute.xlu0 %419
    %v421 = vlaneseq
    %v422 = vshrl.u32 %v421, 7
    %v423 = vadd.s32 %v422, 8
    %424 = vset.pattern.permute.xlu0 %v423
    %425 = vperm.xlu0 %424, %v414
    %v426 = vpop.permute.xlu0 %425
    %v427 = vperm.slane %v67, 1
    %v428 = vlaneseq
    %v429 = vshrl.u32 %v428, 7
    %431 = vset.pattern.permute.xlu0 %v429
    %432 = vperm.xlu0 %431, %v427
    %v433 = vpop.permute.xlu0 %432
    %v434 = vlaneseq
    %v435 = vshrl.u32 %v434, 7
    %v436 = vadd.s32 %v435, 8
    %437 = vset.pattern.permute.xlu0 %v436
    %438 = vperm.xlu0 %437, %v427
    %v439 = vpop.permute.xlu0 %438
    %v440 = vperm.slane %v67, 2
    %v441 = vlaneseq
    %v442 = vshrl.u32 %v441, 7
    %444 = vset.pattern.permute.xlu0 %v442
    %445 = vperm.xlu0 %444, %v440
    %v446 = vpop.permute.xlu0 %445
    %v447 = vlaneseq
    %v448 = vshrl.u32 %v447, 7
    %v449 = vadd.s32 %v448, 8
    %450 = vset.pattern.permute.xlu0 %v449
    %451 = vperm.xlu0 %450, %v440
    %v452 = vpop.permute.xlu0 %451
    %v453 = vperm.slane %v67, 3
    %v454 = vlaneseq
    %v455 = vshrl.u32 %v454, 7
    %457 = vset.pattern.permute.xlu0 %v455
    %458 = vperm.xlu0 %457, %v453
    %v459 = vpop.permute.xlu0 %458
    %v460 = vlaneseq
    %v461 = vshrl.u32 %v460, 7
    %v462 = vadd.s32 %v461, 8
    %463 = vset.pattern.permute.xlu0 %v462
    %464 = vperm.xlu0 %463, %v453
    %v465 = vpop.permute.xlu0 %464
    %v466 = vperm.slane %v67, 4
    %v467 = vlaneseq
    %v468 = vshrl.u32 %v467, 7
    %470 = vset.pattern.permute.xlu0 %v468
    %471 = vperm.xlu0 %470, %v466
    %v472 = vpop.permute.xlu0 %471
    %v473 = vlaneseq
    %v474 = vshrl.u32 %v473, 7
    %v475 = vadd.s32 %v474, 8
    %476 = vset.pattern.permute.xlu0 %v475
    %477 = vperm.xlu0 %476, %v466
    %v478 = vpop.permute.xlu0 %477
    %v479 = vperm.slane %v67, 5
    %v480 = vlaneseq
    %v481 = vshrl.u32 %v480, 7
    %483 = vset.pattern.permute.xlu0 %v481
    %484 = vperm.xlu0 %483, %v479
    %v485 = vpop.permute.xlu0 %484
    %v486 = vlaneseq
    %v487 = vshrl.u32 %v486, 7
    %v488 = vadd.s32 %v487, 8
    %489 = vset.pattern.permute.xlu0 %v488
    %490 = vperm.xlu0 %489, %v479
    %v491 = vpop.permute.xlu0 %490
    %v492 = vperm.slane %v67, 6
    %v493 = vlaneseq
    %v494 = vshrl.u32 %v493, 7
    %496 = vset.pattern.permute.xlu0 %v494
    %497 = vperm.xlu0 %496, %v492
    %v498 = vpop.permute.xlu0 %497
    %v499 = vlaneseq
    %v500 = vshrl.u32 %v499, 7
    %v501 = vadd.s32 %v500, 8
    %502 = vset.pattern.permute.xlu0 %v501
    %503 = vperm.xlu0 %502, %v492
    %v504 = vpop.permute.xlu0 %503
    %v505 = vperm.slane %v67, 7
    %v506 = vlaneseq
    %v507 = vshrl.u32 %v506, 7
    %509 = vset.pattern.permute.xlu0 %v507
    %510 = vperm.xlu0 %509, %v505
    %v511 = vpop.permute.xlu0 %510
    %v512 = vlaneseq
    %v513 = vshrl.u32 %v512, 7
    %v514 = vadd.s32 %v513, 8
    %515 = vset.pattern.permute.xlu0 %v514
    %516 = vperm.xlu0 %515, %v505
    %v517 = vpop.permute.xlu0 %516
    %v518 = vsel %vm278, %v316, 0.0
    %v519 = vsel %vm279, %v322, 0.0
    %v520 = vsel %vm280, %v329, 0.0
    %v521 = vsel %vm281, %v335, 0.0
    %v522 = vsel %vm282, %v342, 0.0
    %v523 = vsel %vm283, %v348, 0.0
    %v524 = vsel %vm284, %v355, 0.0
    %v525 = vsel %vm285, %v361, 0.0
    %v526 = vsel %vm286, %v368, 0.0
    %v527 = vsel %vm287, %v374, 0.0
    %v528 = vsel %vm288, %v381, 0.0
    %v529 = vsel %vm289, %v387, 0.0
    %v530 = vsel %vm290, %v394, 0.0
    %v531 = vsel %vm291, %v400, 0.0
    %v532 = vsel %vm292, %v407, 0.0
    %v533 = vsel %vm293, %v413, 0.0
    %v534 = vsel %vm294, %v420, 0.0
    %v535 = vsel %vm295, %v426, 0.0
    %v536 = vsel %vm296, %v433, 0.0
    %v537 = vsel %vm297, %v439, 0.0
    %v538 = vsel %vm298, %v446, 0.0
    %v539 = vsel %vm299, %v452, 0.0
    %v540 = vsel %vm300, %v459, 0.0
    %v541 = vsel %vm301, %v465, 0.0
    %v542 = vsel %vm302, %v472, 0.0
    %v543 = vsel %vm303, %v478, 0.0
    %v544 = vsel %vm304, %v485, 0.0
    %v545 = vsel %vm305, %v491, 0.0
    %v546 = vsel %vm306, %v498, 0.0
    %v547 = vsel %vm307, %v504, 0.0
    %v548 = vsel %vm308, %v511, 0.0
    %v549 = vsel %vm309, %v517, 0.0
    %vm550 = vcmask 523264
    %v551 = vsel %vm550, %v518, 0.0
    %v552 = vsel %vm550, %v519, 0.0
    %v553 = vadd.f32 %v551, %v552
    %v554 = vrot.slane %v553, 4
    %v555 = vadd.f32 %v553, %v554
    %v556 = vrot.slane %v555, 2
    %v557 = vadd.f32 %v555, %v556
    %v558 = vrot.slane %v557, 1
    %v559 = vadd.f32 %v557, %v558
    %v560 = vsel %vm550, %v520, 0.0
    %v561 = vsel %vm550, %v521, 0.0
    %v562 = vadd.f32 %v560, %v561
    %v563 = vrot.slane %v562, 4
    %v564 = vadd.f32 %v562, %v563
    %v565 = vrot.slane %v564, 2
    %v566 = vadd.f32 %v564, %v565
    %v567 = vrot.slane %v566, 1
    %v568 = vadd.f32 %v566, %v567
    %v569 = vsel %vm550, %v522, 0.0
    %v570 = vsel %vm550, %v523, 0.0
    %v571 = vadd.f32 %v569, %v570
    %v572 = vrot.slane %v571, 4
    %v573 = vadd.f32 %v571, %v572
    %v574 = vrot.slane %v573, 2
    %v575 = vadd.f32 %v573, %v574
    %v576 = vrot.slane %v575, 1
    %v577 = vadd.f32 %v575, %v576
    %v578 = vsel %vm550, %v524, 0.0
    %v579 = vsel %vm550, %v525, 0.0
    %v580 = vadd.f32 %v578, %v579
    %v581 = vrot.slane %v580, 4
    %v582 = vadd.f32 %v580, %v581
    %v583 = vrot.slane %v582, 2
    %v584 = vadd.f32 %v582, %v583
    %v585 = vrot.slane %v584, 1
    %v586 = vadd.f32 %v584, %v585
    %v587 = vsel %vm550, %v526, 0.0
    %v588 = vsel %vm550, %v527, 0.0
    %v589 = vadd.f32 %v587, %v588
    %v590 = vrot.slane %v589, 4
    %v591 = vadd.f32 %v589, %v590
    %v592 = vrot.slane %v591, 2
    %v593 = vadd.f32 %v591, %v592
    %v594 = vrot.slane %v593, 1
    %v595 = vadd.f32 %v593, %v594
    %v596 = vsel %vm550, %v528, 0.0
    %v597 = vsel %vm550, %v529, 0.0
    %v598 = vadd.f32 %v596, %v597
    %v599 = vrot.slane %v598, 4
    %v600 = vadd.f32 %v598, %v599
    %v601 = vrot.slane %v600, 2
    %v602 = vadd.f32 %v600, %v601
    %v603 = vrot.slane %v602, 1
    %v604 = vadd.f32 %v602, %v603
    %v605 = vsel %vm550, %v530, 0.0
    %v606 = vsel %vm550, %v531, 0.0
    %v607 = vadd.f32 %v605, %v606
    %v608 = vrot.slane %v607, 4
    %v609 = vadd.f32 %v607, %v608
    %v610 = vrot.slane %v609, 2
    %v611 = vadd.f32 %v609, %v610
    %v612 = vrot.slane %v611, 1
    %v613 = vadd.f32 %v611, %v612
    %v614 = vsel %vm550, %v532, 0.0
    %v615 = vsel %vm550, %v533, 0.0
    %v616 = vadd.f32 %v614, %v615
    %v617 = vrot.slane %v616, 4
    %v618 = vadd.f32 %v616, %v617
    %v619 = vrot.slane %v618, 2
    %v620 = vadd.f32 %v618, %v619
    %v621 = vrot.slane %v620, 1
    %v622 = vadd.f32 %v620, %v621
    %v623 = vsel %vm550, %v534, 0.0
    %v624 = vsel %vm550, %v535, 0.0
    %v625 = vadd.f32 %v623, %v624
    %v626 = vrot.slane %v625, 4
    %v627 = vadd.f32 %v625, %v626
    %v628 = vrot.slane %v627, 2
    %v629 = vadd.f32 %v627, %v628
    %v630 = vrot.slane %v629, 1
    %v631 = vadd.f32 %v629, %v630
    %v632 = vsel %vm550, %v536, 0.0
    %v633 = vsel %vm550, %v537, 0.0
    %v634 = vadd.f32 %v632, %v633
    %v635 = vrot.slane %v634, 4
    %v636 = vadd.f32 %v634, %v635
    %v637 = vrot.slane %v636, 2
    %v638 = vadd.f32 %v636, %v637
    %v639 = vrot.slane %v638, 1
    %v640 = vadd.f32 %v638, %v639
    %v641 = vsel %vm550, %v538, 0.0
    %v642 = vsel %vm550, %v539, 0.0
    %v643 = vadd.f32 %v641, %v642
    %v644 = vrot.slane %v643, 4
    %v645 = vadd.f32 %v643, %v644
    %v646 = vrot.slane %v645, 2
    %v647 = vadd.f32 %v645, %v646
    %v648 = vrot.slane %v647, 1
    %v649 = vadd.f32 %v647, %v648
    %v650 = vsel %vm550, %v540, 0.0
    %v651 = vsel %vm550, %v541, 0.0
    %v652 = vadd.f32 %v650, %v651
    %v653 = vrot.slane %v652, 4
    %v654 = vadd.f32 %v652, %v653
    %v655 = vrot.slane %v654, 2
    %v656 = vadd.f32 %v654, %v655
    %v657 = vrot.slane %v656, 1
    %v658 = vadd.f32 %v656, %v657
    %v659 = vsel %vm550, %v542, 0.0
    %v660 = vsel %vm550, %v543, 0.0
    %v661 = vadd.f32 %v659, %v660
    %v662 = vrot.slane %v661, 4
    %v663 = vadd.f32 %v661, %v662
    %v664 = vrot.slane %v663, 2
    %v665 = vadd.f32 %v663, %v664
    %v666 = vrot.slane %v665, 1
    %v667 = vadd.f32 %v665, %v666
    %v668 = vsel %vm550, %v544, 0.0
    %v669 = vsel %vm550, %v545, 0.0
    %v670 = vadd.f32 %v668, %v669
    %v671 = vrot.slane %v670, 4
    %v672 = vadd.f32 %v670, %v671
    %v673 = vrot.slane %v672, 2
    %v674 = vadd.f32 %v672, %v673
    %v675 = vrot.slane %v674, 1
    %v676 = vadd.f32 %v674, %v675
    %v677 = vsel %vm550, %v546, 0.0
    %v678 = vsel %vm550, %v547, 0.0
    %v679 = vadd.f32 %v677, %v678
    %v680 = vrot.slane %v679, 4
    %v681 = vadd.f32 %v679, %v680
    %v682 = vrot.slane %v681, 2
    %v683 = vadd.f32 %v681, %v682
    %v684 = vrot.slane %v683, 1
    %v685 = vadd.f32 %v683, %v684
    %v686 = vsel %vm550, %v548, 0.0
    %v687 = vsel %vm550, %v549, 0.0
    %v688 = vadd.f32 %v686, %v687
    %v689 = vrot.slane %v688, 4
    %v690 = vadd.f32 %v688, %v689
    %v691 = vrot.slane %v690, 2
    %v692 = vadd.f32 %v690, %v691
    %v693 = vrot.slane %v692, 1
    %v694 = vadd.f32 %v692, %v693
    %v695 = vpack.c.bf16 %v559, %v559
    %v696 = vpack.c.bf16 %v568, %v568
    %v697 = vpack.c.bf16 %v577, %v577
    %v698 = vpack.c.bf16 %v586, %v586
    %v699 = vpack.c.bf16 %v595, %v595
    %v700 = vpack.c.bf16 %v604, %v604
    %v701 = vpack.c.bf16 %v613, %v613
    %v702 = vpack.c.bf16 %v622, %v622
    %v703 = vpack.c.bf16 %v631, %v631
    %v704 = vpack.c.bf16 %v640, %v640
    %v705 = vpack.c.bf16 %v649, %v649
    %v706 = vpack.c.bf16 %v658, %v658
    %v707 = vpack.c.bf16 %v667, %v667
    %v708 = vpack.c.bf16 %v676, %v676
    %v709 = vpack.c.bf16 %v685, %v685
    %v710 = vpack.c.bf16 %v694, %v694
    %v711 = vld [vmem:[#allocation6] sm:$0xff]
    %v712 = vld [vmem:[#allocation6 + $0x8] sm:$0xff]
    %v713 = vld [vmem:[#allocation6 + $0x10] sm:$0xff]
    %v714 = vld [vmem:[#allocation6 + $0x18] sm:$0xff]
    %v715 = vld [vmem:[#allocation6 + $0x20] sm:$0xff]
    %v716 = vld [vmem:[#allocation6 + $0x28] sm:$0xff]
    %v717 = vld [vmem:[#allocation6 + $0x30] sm:$0xff]
    %v718 = vld [vmem:[#allocation6 + $0x38] sm:$0xff]
    %v719 = vld [vmem:[#allocation6 + $0x40] sm:$0xff]
    %v720 = vld [vmem:[#allocation6 + $0x48] sm:$0xff]
    %v721 = vld [vmem:[#allocation6 + $0x50] sm:$0xff]
    %v722 = vld [vmem:[#allocation6 + $0x58] sm:$0xff]
    %v723 = vld [vmem:[#allocation6 + $0x60] sm:$0xff]
    %v724 = vld [vmem:[#allocation6 + $0x68] sm:$0xff]
    %v725 = vld [vmem:[#allocation6 + $0x70] sm:$0xff]
    %v726 = vld [vmem:[#allocation6 + $0x78] sm:$0xff]
    %v727 = vld [vmem:[#allocation6 + $0x80] sm:$0xff]
    %v728 = vld [vmem:[#allocation6 + $0x88] sm:$0xff]
    %v729 = vld [vmem:[#allocation6 + $0x90] sm:$0xff]
    %v730 = vld [vmem:[#allocation6 + $0x98] sm:$0xff]
    %v731 = vld [vmem:[#allocation6 + $0xa0] sm:$0xff]
    %v732 = vld [vmem:[#allocation6 + $0xa8] sm:$0xff]
    %v733 = vld [vmem:[#allocation6 + $0xb0] sm:$0xff]
    %v734 = vld [vmem:[#allocation6 + $0xb8] sm:$0xff]
    %v751 = vunpack.c.l.b16 %v695
    %v752 = vunpack.c.l.b16 %v696
    %v753 = vunpack.c.l.b16 %v697
    %v754 = vunpack.c.l.b16 %v698
    %v755 = vunpack.c.l.b16 %v699
    %v756 = vunpack.c.l.b16 %v700
    %v757 = vunpack.c.l.b16 %v701
    %v758 = vunpack.c.l.b16 %v702
    %v759 = vunpack.c.l.b16 %v703
    %v760 = vunpack.c.l.b16 %v704
    %v761 = vunpack.c.l.b16 %v705
    %v762 = vunpack.c.l.b16 %v706
    %v763 = vunpack.c.l.b16 %v707
    %v764 = vunpack.c.l.b16 %v708
    %v765 = vunpack.c.l.b16 %v709
    %v766 = vunpack.c.l.b16 %v710
    %vm767 = vcmask 1041409
    %v768 = vsel %vm767, %v752, %v751
    %vm769 = vcmask 1042434
    %v770 = vsel %vm769, %v753, %v768
    %vm771 = vcmask 1043459
    %v772 = vsel %vm771, %v754, %v770
    %vm773 = vcmask 1044484
    %v774 = vsel %vm773, %v755, %v772
    %vm775 = vcmask 1045509
    %v776 = vsel %vm775, %v756, %v774
    %vm777 = vcmask 1046534
    %v778 = vsel %vm777, %v757, %v776
    %vm779 = vcmask 1047559
    %v780 = vsel %vm779, %v758, %v778
    %v781 = vsel %vm767, %v760, %v759
    %v782 = vsel %vm769, %v761, %v781
    %v783 = vsel %vm771, %v762, %v782
    %v784 = vsel %vm773, %v763, %v783
    %v785 = vsel %vm775, %v764, %v784
    %v786 = vsel %vm777, %v765, %v785
    %v787 = vsel %vm779, %v766, %v786
    %v788 = vpack.c.b16 %v787, %v780
    %v813 = vunpack.c.l.b16 %v711
    %v814 = vunpack.c.h.b16 %v711
    %v815 = vunpack.c.l.b16 %v712
    %v816 = vunpack.c.h.b16 %v712
    %v817 = vunpack.c.l.b16 %v713
    %v818 = vunpack.c.h.b16 %v713
    %v819 = vunpack.c.l.b16 %v714
    %v820 = vunpack.c.h.b16 %v714
    %v821 = vunpack.c.l.b16 %v715
    %v822 = vunpack.c.h.b16 %v715
    %v823 = vunpack.c.l.b16 %v716
    %v824 = vunpack.c.h.b16 %v716
    %v825 = vunpack.c.l.b16 %v717
    %v826 = vunpack.c.h.b16 %v717
    %v827 = vunpack.c.l.b16 %v718
    %v828 = vunpack.c.h.b16 %v718
    %v829 = vunpack.c.l.b16 %v719
    %v830 = vunpack.c.h.b16 %v719
    %v831 = vunpack.c.l.b16 %v720
    %v832 = vunpack.c.h.b16 %v720
    %v833 = vunpack.c.l.b16 %v721
    %v834 = vunpack.c.h.b16 %v721
    %v835 = vunpack.c.l.b16 %v722
    %v836 = vunpack.c.h.b16 %v722
    %v837 = vunpack.c.l.b16 %v723
    %v838 = vunpack.c.h.b16 %v723
    %v839 = vunpack.c.l.b16 %v724
    %v840 = vunpack.c.h.b16 %v724
    %v841 = vunpack.c.l.b16 %v725
    %v842 = vunpack.c.h.b16 %v725
    %v843 = vunpack.c.l.b16 %v726
    %v844 = vunpack.c.h.b16 %v726
    %v845 = vunpack.c.l.b16 %v727
    %v846 = vunpack.c.h.b16 %v727
    %v847 = vunpack.c.l.b16 %v728
    %v848 = vunpack.c.h.b16 %v728
    %v849 = vunpack.c.l.b16 %v729
    %v850 = vunpack.c.h.b16 %v729
    %v851 = vunpack.c.l.b16 %v730
    %v852 = vunpack.c.h.b16 %v730
    %v853 = vunpack.c.l.b16 %v731
    %v854 = vunpack.c.h.b16 %v731
    %v855 = vunpack.c.l.b16 %v732
    %v856 = vunpack.c.h.b16 %v732
    %v857 = vunpack.c.l.b16 %v733
    %v858 = vunpack.c.h.b16 %v733
    %v859 = vunpack.c.l.b16 %v734
    %v860 = vunpack.c.h.b16 %v734
    %v861 = vpack.c.b16 %v819, %v813
    %v862 = vpack.c.b16 %v820, %v814
    %v863 = vpack.c.b16 %v821, %v815
    %v864 = vpack.c.b16 %v822, %v816
    %v865 = vpack.c.b16 %v823, %v817
    %v866 = vpack.c.b16 %v824, %v818
    %v867 = vpack.c.b16 %v831, %v825
    %v868 = vpack.c.b16 %v832, %v826
    %v869 = vpack.c.b16 %v833, %v827
    %v870 = vpack.c.b16 %v834, %v828
    %v871 = vpack.c.b16 %v835, %v829
    %v872 = vpack.c.b16 %v836, %v830
    %v873 = vpack.c.b16 %v843, %v837
    %v874 = vpack.c.b16 %v844, %v838
    %v875 = vpack.c.b16 %v845, %v839
    %v876 = vpack.c.b16 %v846, %v840
    %v877 = vpack.c.b16 %v847, %v841
    %v878 = vpack.c.b16 %v848, %v842
    %v879 = vpack.c.b16 %v855, %v849
    %v880 = vpack.c.b16 %v856, %v850
    %v881 = vpack.c.b16 %v857, %v851
    %v882 = vpack.c.b16 %v858, %v852
    %v883 = vpack.c.b16 %v859, %v853
    %v884 = vpack.c.b16 %v860, %v854
    %v910 = vsel %vm550, %v788, 0
    %912 = vmatpush.bf16.msra.mxu0 0
    %913 = vmatpush.bf16.msra.mxu0 0
    %914 = vmatpush.bf16.msra.mxu0 0
    %915 = vmatpush.bf16.msra.mxu0 0
    %916 = vmatpush.bf16.msra.mxu0 %v879
    %917 = vmatpush.bf16.msra.mxu0 %v873
    %918 = vmatpush.bf16.msra.mxu0 %v867
    %919 = vmatpush.bf16.msra.mxu0 %v861
    %920 = vmatmul.bf16.gmra.mxu0 %v910
    %v921 = vpop.f32.mrf.mxu0
    %v922 = vadd.f32 0.0, %v921
    %v923 = vpop.f32.mrf.mxu0
    %v924 = vadd.f32 0.0, %v923
    %925 = vdwg.mxu0
    %926 = vmatpush.bf16.msra.mxu0 0
    %927 = vmatpush.bf16.msra.mxu0 0
    %928 = vmatpush.bf16.msra.mxu0 0
    %929 = vmatpush.bf16.msra.mxu0 0
    %930 = vmatpush.bf16.msra.mxu0 %v880
    %931 = vmatpush.bf16.msra.mxu0 %v874
    %932 = vmatpush.bf16.msra.mxu0 %v868
    %933 = vmatpush.bf16.msra.mxu0 %v862
    %934 = vmatmul.bf16.gmra.mxu0 %v910
    %v935 = vpop.f32.mrf.mxu0
    %v936 = vadd.f32 0.0, %v935
    %v937 = vpop.f32.mrf.mxu0
    %v938 = vadd.f32 0.0, %v937
    %939 = vdwg.mxu0
    %940 = vmatpush.bf16.msra.mxu0 0
    %941 = vmatpush.bf16.msra.mxu0 0
    %942 = vmatpush.bf16.msra.mxu0 0
    %943 = vmatpush.bf16.msra.mxu0 0
    %944 = vmatpush.bf16.msra.mxu0 %v881
    %945 = vmatpush.bf16.msra.mxu0 %v875
    %946 = vmatpush.bf16.msra.mxu0 %v869
    %947 = vmatpush.bf16.msra.mxu0 %v863
    %948 = vmatmul.bf16.gmra.mxu0 %v910
    %v949 = vpop.f32.mrf.mxu0
    %v950 = vadd.f32 0.0, %v949
    %v951 = vpop.f32.mrf.mxu0
    %v952 = vadd.f32 0.0, %v951
    %953 = vdwg.mxu0
    %954 = vmatpush.bf16.msra.mxu0 0
    %955 = vmatpush.bf16.msra.mxu0 0
    %956 = vmatpush.bf16.msra.mxu0 0
    %957 = vmatpush.bf16.msra.mxu0 0
    %958 = vmatpush.bf16.msra.mxu0 %v882
    %959 = vmatpush.bf16.msra.mxu0 %v876
    %960 = vmatpush.bf16.msra.mxu0 %v870
    %961 = vmatpush.bf16.msra.mxu0 %v864
    %962 = vmatmul.bf16.gmra.mxu0 %v910
    %v963 = vpop.f32.mrf.mxu0
    %v964 = vadd.f32 0.0, %v963
    %v965 = vpop.f32.mrf.mxu0
    %v966 = vadd.f32 0.0, %v965
    %967 = vdwg.mxu0
    %968 = vmatpush.bf16.msra.mxu0 0
    %969 = vmatpush.bf16.msra.mxu0 0
    %970 = vmatpush.bf16.msra.mxu0 0
    %971 = vmatpush.bf16.msra.mxu0 0
    %972 = vmatpush.bf16.msra.mxu0 %v883
    %973 = vmatpush.bf16.msra.mxu0 %v877
    %974 = vmatpush.bf16.msra.mxu0 %v871
    %975 = vmatpush.bf16.msra.mxu0 %v865
    %976 = vmatmul.bf16.gmra.mxu0 %v910
    %v977 = vpop.f32.mrf.mxu0
    %v978 = vadd.f32 0.0, %v977
    %v979 = vpop.f32.mrf.mxu0
    %v980 = vadd.f32 0.0, %v979
    %981 = vdwg.mxu0
    %982 = vmatpush.bf16.msra.mxu0 0
    %983 = vmatpush.bf16.msra.mxu0 0
    %984 = vmatpush.bf16.msra.mxu0 0
    %985 = vmatpush.bf16.msra.mxu0 0
    %986 = vmatpush.bf16.msra.mxu0 %v884
    %987 = vmatpush.bf16.msra.mxu0 %v878
    %988 = vmatpush.bf16.msra.mxu0 %v872
    %989 = vmatpush.bf16.msra.mxu0 %v866
    %990 = vmatmul.bf16.gmra.mxu0 %v910
    %v991 = vpop.f32.mrf.mxu0
    %v992 = vadd.f32 0.0, %v991
    %v993 = vpop.f32.mrf.mxu0
    %v994 = vadd.f32 0.0, %v993
    %995 = vdwg.mxu0
    %vm996 = vcmask 130048
    %v997 = vsel %vm996, %v66, 0.0
    %998 = vadd.xlane.f32.xlu0 %v997
    %v999 = vpop.xlane.xlu0 %998
    %v1000 = vsel %vm996, %v67, 0.0
    %1001 = vadd.xlane.f32.xlu0 %v1000
    %v1002 = vpop.xlane.xlu0 %1001
    %v1003 = vmax.f32 %v999, 1e-09
    %v1004 = vmax.f32 %v1002, 1e-09
    %v1005 = vrcp.pop %v1003
    %v1006 = vrcp.pop %v1004
    %v1007 = vmul.f32 %v922, %v1005
    %v1008 = vmul.f32 %v936, %v1005
    %v1009 = vmul.f32 %v950, %v1005
    %v1010 = vmul.f32 %v964, %v1005
    %v1011 = vmul.f32 %v978, %v1005
    %v1012 = vmul.f32 %v992, %v1005
    %v1013 = vmul.f32 %v924, %v1006
    %v1014 = vmul.f32 %v938, %v1006
    %v1015 = vmul.f32 %v952, %v1006
    %v1016 = vmul.f32 %v966, %v1006
    %v1017 = vmul.f32 %v980, %v1006
    %v1018 = vmul.f32 %v994, %v1006
    %1019 = vst [vmem:[%s3] sm:$0xff] %v1007
    %1020 = vst [vmem:[%s3 + $0x8] sm:$0xff] %v1008
    %1021 = vst [vmem:[%s3 + $0x10] sm:$0xff] %v1009
    %1022 = vst [vmem:[%s3 + $0x18] sm:$0xff] %v1010
    %1023 = vst [vmem:[%s3 + $0x20] sm:$0xff] %v1011
    %1024 = vst [vmem:[%s3 + $0x28] sm:$0xff] %v1012
    %1025 = vst [vmem:[%s3 + $0x30] sm:$0xff] %v1013
    %1026 = vst [vmem:[%s3 + $0x38] sm:$0xff] %v1014
    %1027 = vst [vmem:[%s3 + $0x40] sm:$0xff] %v1015
    %1028 = vst [vmem:[%s3 + $0x48] sm:$0xff] %v1016
    %1029 = vst [vmem:[%s3 + $0x50] sm:$0xff] %v1017
    %1030 = vst [vmem:[%s3 + $0x58] sm:$0xff] %v1018
    // Predicated region
    $region26: #{_lambda_.2} parent=1 // pred_check
      _
    $region27: #{_lambda_.2} parent=1 // pred_check_branch
      %1032 = sbr.rel (0) target = $region29
    $region28: #{_lambda_.2} parent=1 // pred_region
      _
    $region29: #{_lambda_.2} parent=1 // pred_fallthru
      _
    // Predicated region
    $region30: #{_lambda_.2} parent=1 // pred_check
      _
    $region31: #{_lambda_.2} parent=1 // pred_check_branch
      %1034 = sbr.rel (0) target = $region33
    $region32: #{_lambda_.2} parent=1 // pred_region
      _
    $region33: #{_lambda_.2} parent=1 // pred_fallthru
      _
    %1035 = vsyncpa [#allocation3], 1
    %1036 = vsyncpa [#allocation5], 1

// kernel: _lambda_.3
$region0: #{_lambda_.3}
  #allocation0 [shape = 'u32[]', space=smem, size = 0x4, offset = 0x4, fixed_abs, tag = 'smem constant byte address 0x4 - core index']
  #allocation1 [shape = 'u32[72,128]{1,0:T(1,128)}', space=vmem, size = 0x9000, scoped, tag = 'internal scratch']
  %s0 = inlined_call_operand.vmem [shape: bf16[2,8,768], index: 0, kind: input, shape index: {}]
  %s1 = inlined_call_operand.hbm [shape: bf16[768,512], index: 1, kind: input, shape index: {}]
  %s2 = inlined_call_operand.vmem [shape: f32[1,512], index: 2, kind: input, shape index: {}]
  %s3 = inlined_call_operand.hbm [shape: f32[2,512], index: 3, kind: output, shape index: {}]
  %s4 = sld [smem:[#allocation0]]
  $region26: #{_lambda_.3} parent=0
    _
  %s6 = ssub.s32 1, %s4
  %s7 = scalar_select 0, %s6, %s4
  $region1: #{_lambda_.3} parent=0
    #allocation2 [shape = 'u8[786432]{0}', space=vmem, size = 0xc0000, scoped, tag = 'input window, operand 1, single buffered']
    #allocation3 [shape = 's32[1]{0}', space=sflag, size = 0x4, scoped, tag = 'scoped memory for _lambda_.3']
    #allocation4 [shape = 's32[1]{0}', space=sflag, size = 0x4, scoped, tag = 'scoped memory for _lambda_.3']
    #allocation5 [shape = 'u8[4096]{0}', space=vmem, size = 0x1000, scoped, tag = 'output window, operand 0, single buffered']
    %8 = vsyncpa [#allocation3], 0
    %9 = vsyncpa [#allocation4], 0
    // Predicated region
    $region2: #{_lambda_.3} parent=1 // pred_check
      _
    $region3: #{_lambda_.3} parent=1 // pred_check_branch
      %11 = sbr.rel (0) target = $region5
    $region4: #{_lambda_.3} parent=1 // pred_region
      _
    $region5: #{_lambda_.3} parent=1 // pred_fallthru
      _
    // Predicated region
    $region6: #{_lambda_.3} parent=1 // pred_check
      _
    $region7: #{_lambda_.3} parent=1 // pred_check_branch
      %13 = sbr.rel (0) target = $region9
    $region8: #{_lambda_.3} parent=1 // pred_region
      %15 = vsyncadd [#allocation3], 0
      %s16 = sshll.u32 %s1, 4
      %s17 = int_to_ptr.hbm [resolvable:$true] %s16
      %s18 = sshll.u32 [#allocation2], 4
      %s19 = int_to_ptr.vmem [resolvable:$true] %s18
      %24 = dma.hbm_to_vmem [thread:$0]  %s17, 24576, %s19, [#allocation3], 256, 256, 16
    $region9: #{_lambda_.3} parent=1 // pred_fallthru
      _
    // Predicated region
    $region10: #{_lambda_.3} parent=1 // pred_check
      _
    $region11: #{_lambda_.3} parent=1 // pred_check_branch
      %26 = sbr.rel (0) target = $region13
    $region12: #{_lambda_.3} parent=1 // pred_region
      _
    $region13: #{_lambda_.3} parent=1 // pred_fallthru
      _
    // Predicated region
    $region14: #{_lambda_.3} parent=1 // pred_check
      _
    $region15: #{_lambda_.3} parent=1 // pred_check_branch
      %28 = sbr.rel (0) target = $region17
    $region16: #{_lambda_.3} parent=1 // pred_region
      %30 = dma.done [#allocation3], 24576
    $region17: #{_lambda_.3} parent=1 // pred_fallthru
      _
    %v32 = vld [vmem:[%s0] sm:$0xff]
    %v33 = vld [vmem:[%s0 + $0x8] sm:$0xff]
    %v34 = vld [vmem:[%s0 + $0x10] sm:$0xff]
    %v35 = vld [vmem:[%s0 + $0x18] sm:$0xff]
    %v36 = vld [vmem:[%s0 + $0x20] sm:$0xff]
    %v37 = vld [vmem:[%s0 + $0x28] sm:$0xff]
    %v41 = vunpack.c.l.b16 %v32
    %v42 = vunpack.c.h.b16 %v32
    %v43 = vunpack.c.l.b16 %v33
    %v44 = vunpack.c.h.b16 %v33
    %v45 = vunpack.c.l.b16 %v34
    %v46 = vunpack.c.h.b16 %v34
    %v47 = vpack.c.b16 %v41, %v41
    %v48 = vpack.c.b16 %v42, %v42
    %v49 = vpack.c.b16 %v43, %v43
    %v50 = vpack.c.b16 %v44, %v44
    %v51 = vpack.c.b16 %v45, %v45
    %v52 = vpack.c.b16 %v46, %v46
    %59 = vmatpush.bf16.xpose.msra.mxu0 0
    %60 = vmatpush.bf16.xpose.msra.mxu0 0
    %61 = vmatpush.bf16.xpose.msra.mxu0 0
    %62 = vmatpush.bf16.xpose.msra.mxu0 0
    %63 = vmatpush.bf16.xpose.msra.mxu0 0
    %64 = vmatpush.bf16.xpose.msra.mxu0 0
    %65 = vmatpush.bf16.xpose.msra.mxu0 0
    %66 = vmatpush.bf16.xpose.msra.mxu0 %v47
    %67 = vmatmul.bf16.gmra.mxu0 %v47
    %v68 = vpop.f32.mrf.mxu0
    %v69 = vadd.f32 0.0, %v68
    %v70 = vpop.f32.mrf.mxu0
    %71 = vdwg.mxu0
    %72 = vmatpush.bf16.xpose.msra.mxu0 0
    %73 = vmatpush.bf16.xpose.msra.mxu0 0
    %74 = vmatpush.bf16.xpose.msra.mxu0 0
    %75 = vmatpush.bf16.xpose.msra.mxu0 0
    %76 = vmatpush.bf16.xpose.msra.mxu0 0
    %77 = vmatpush.bf16.xpose.msra.mxu0 0
    %78 = vmatpush.bf16.xpose.msra.mxu0 0
    %79 = vmatpush.bf16.xpose.msra.mxu0 %v48
    %80 = vmatmul.bf16.gmra.mxu0 %v48
    %v81 = vpop.f32.mrf.mxu0
    %v82 = vadd.f32 %v69, %v81
    %v83 = vpop.f32.mrf.mxu0
    %84 = vdwg.mxu0
    %85 = vmatpush.bf16.xpose.msra.mxu0 0
    %86 = vmatpush.bf16.xpose.msra.mxu0 0
    %87 = vmatpush.bf16.xpose.msra.mxu0 0
    %88 = vmatpush.bf16.xpose.msra.mxu0 0
    %89 = vmatpush.bf16.xpose.msra.mxu0 0
    %90 = vmatpush.bf16.xpose.msra.mxu0 0
    %91 = vmatpush.bf16.xpose.msra.mxu0 0
    %92 = vmatpush.bf16.xpose.msra.mxu0 %v49
    %93 = vmatmul.bf16.gmra.mxu0 %v49
    %v94 = vpop.f32.mrf.mxu0
    %v95 = vadd.f32 %v82, %v94
    %v96 = vpop.f32.mrf.mxu0
    %97 = vdwg.mxu0
    %98 = vmatpush.bf16.xpose.msra.mxu0 0
    %99 = vmatpush.bf16.xpose.msra.mxu0 0
    %100 = vmatpush.bf16.xpose.msra.mxu0 0
    %101 = vmatpush.bf16.xpose.msra.mxu0 0
    %102 = vmatpush.bf16.xpose.msra.mxu0 0
    %103 = vmatpush.bf16.xpose.msra.mxu0 0
    %104 = vmatpush.bf16.xpose.msra.mxu0 0
    %105 = vmatpush.bf16.xpose.msra.mxu0 %v50
    %106 = vmatmul.bf16.gmra.mxu0 %v50
    %v107 = vpop.f32.mrf.mxu0
    %v108 = vadd.f32 %v95, %v107
    %v109 = vpop.f32.mrf.mxu0
    %110 = vdwg.mxu0
    %111 = vmatpush.bf16.xpose.msra.mxu0 0
    %112 = vmatpush.bf16.xpose.msra.mxu0 0
    %113 = vmatpush.bf16.xpose.msra.mxu0 0
    %114 = vmatpush.bf16.xpose.msra.mxu0 0
    %115 = vmatpush.bf16.xpose.msra.mxu0 0
    %116 = vmatpush.bf16.xpose.msra.mxu0 0
    %117 = vmatpush.bf16.xpose.msra.mxu0 0
    %118 = vmatpush.bf16.xpose.msra.mxu0 %v51
    %119 = vmatmul.bf16.gmra.mxu0 %v51
    %v120 = vpop.f32.mrf.mxu0
    %v121 = vadd.f32 %v108, %v120
    %v122 = vpop.f32.mrf.mxu0
    %123 = vdwg.mxu0
    %124 = vmatpush.bf16.xpose.msra.mxu0 0
    %125 = vmatpush.bf16.xpose.msra.mxu0 0
    %126 = vmatpush.bf16.xpose.msra.mxu0 0
    %127 = vmatpush.bf16.xpose.msra.mxu0 0
    %128 = vmatpush.bf16.xpose.msra.mxu0 0
    %129 = vmatpush.bf16.xpose.msra.mxu0 0
    %130 = vmatpush.bf16.xpose.msra.mxu0 0
    %131 = vmatpush.bf16.xpose.msra.mxu0 %v52
    %132 = vmatmul.bf16.gmra.mxu0 %v52
    %v133 = vpop.f32.mrf.mxu0
    %v134 = vadd.f32 %v121, %v133
    %v135 = vpop.f32.mrf.mxu0
    %136 = vdwg.mxu0
    %v140 = vunpack.c.l.b16 %v35
    %v141 = vunpack.c.h.b16 %v35
    %v142 = vunpack.c.l.b16 %v36
    %v143 = vunpack.c.h.b16 %v36
    %v144 = vunpack.c.l.b16 %v37
    %v145 = vunpack.c.h.b16 %v37
    %v146 = vpack.c.b16 %v140, %v140
    %v147 = vpack.c.b16 %v141, %v141
    %v148 = vpack.c.b16 %v142, %v142
    %v149 = vpack.c.b16 %v143, %v143
    %v150 = vpack.c.b16 %v144, %v144
    %v151 = vpack.c.b16 %v145, %v145
    %158 = vmatpush.bf16.xpose.msra.mxu0 0
    %159 = vmatpush.bf16.xpose.msra.mxu0 0
    %160 = vmatpush.bf16.xpose.msra.mxu0 0
    %161 = vmatpush.bf16.xpose.msra.mxu0 0
    %162 = vmatpush.bf16.xpose.msra.mxu0 0
    %163 = vmatpush.bf16.xpose.msra.mxu0 0
    %164 = vmatpush.bf16.xpose.msra.mxu0 0
    %165 = vmatpush.bf16.xpose.msra.mxu0 %v146
    %166 = vmatmul.bf16.gmra.mxu0 %v146
    %v167 = vpop.f32.mrf.mxu0
    %v168 = vadd.f32 0.0, %v167
    %v169 = vpop.f32.mrf.mxu0
    %170 = vdwg.mxu0
    %171 = vmatpush.bf16.xpose.msra.mxu0 0
    %172 = vmatpush.bf16.xpose.msra.mxu0 0
    %173 = vmatpush.bf16.xpose.msra.mxu0 0
    %174 = vmatpush.bf16.xpose.msra.mxu0 0
    %175 = vmatpush.bf16.xpose.msra.mxu0 0
    %176 = vmatpush.bf16.xpose.msra.mxu0 0
    %177 = vmatpush.bf16.xpose.msra.mxu0 0
    %178 = vmatpush.bf16.xpose.msra.mxu0 %v147
    %179 = vmatmul.bf16.gmra.mxu0 %v147
    %v180 = vpop.f32.mrf.mxu0
    %v181 = vadd.f32 %v168, %v180
    %v182 = vpop.f32.mrf.mxu0
    %183 = vdwg.mxu0
    %184 = vmatpush.bf16.xpose.msra.mxu0 0
    %185 = vmatpush.bf16.xpose.msra.mxu0 0
    %186 = vmatpush.bf16.xpose.msra.mxu0 0
    %187 = vmatpush.bf16.xpose.msra.mxu0 0
    %188 = vmatpush.bf16.xpose.msra.mxu0 0
    %189 = vmatpush.bf16.xpose.msra.mxu0 0
    %190 = vmatpush.bf16.xpose.msra.mxu0 0
    %191 = vmatpush.bf16.xpose.msra.mxu0 %v148
    %192 = vmatmul.bf16.gmra.mxu0 %v148
    %v193 = vpop.f32.mrf.mxu0
    %v194 = vadd.f32 %v181, %v193
    %v195 = vpop.f32.mrf.mxu0
    %196 = vdwg.mxu0
    %197 = vmatpush.bf16.xpose.msra.mxu0 0
    %198 = vmatpush.bf16.xpose.msra.mxu0 0
    %199 = vmatpush.bf16.xpose.msra.mxu0 0
    %200 = vmatpush.bf16.xpose.msra.mxu0 0
    %201 = vmatpush.bf16.xpose.msra.mxu0 0
    %202 = vmatpush.bf16.xpose.msra.mxu0 0
    %203 = vmatpush.bf16.xpose.msra.mxu0 0
    %204 = vmatpush.bf16.xpose.msra.mxu0 %v149
    %205 = vmatmul.bf16.gmra.mxu0 %v149
    %v206 = vpop.f32.mrf.mxu0
    %v207 = vadd.f32 %v194, %v206
    %v208 = vpop.f32.mrf.mxu0
    %209 = vdwg.mxu0
    %210 = vmatpush.bf16.xpose.msra.mxu0 0
    %211 = vmatpush.bf16.xpose.msra.mxu0 0
    %212 = vmatpush.bf16.xpose.msra.mxu0 0
    %213 = vmatpush.bf16.xpose.msra.mxu0 0
    %214 = vmatpush.bf16.xpose.msra.mxu0 0
    %215 = vmatpush.bf16.xpose.msra.mxu0 0
    %216 = vmatpush.bf16.xpose.msra.mxu0 0
    %217 = vmatpush.bf16.xpose.msra.mxu0 %v150
    %218 = vmatmul.bf16.gmra.mxu0 %v150
    %v219 = vpop.f32.mrf.mxu0
    %v220 = vadd.f32 %v207, %v219
    %v221 = vpop.f32.mrf.mxu0
    %222 = vdwg.mxu0
    %223 = vmatpush.bf16.xpose.msra.mxu0 0
    %224 = vmatpush.bf16.xpose.msra.mxu0 0
    %225 = vmatpush.bf16.xpose.msra.mxu0 0
    %226 = vmatpush.bf16.xpose.msra.mxu0 0
    %227 = vmatpush.bf16.xpose.msra.mxu0 0
    %228 = vmatpush.bf16.xpose.msra.mxu0 0
    %229 = vmatpush.bf16.xpose.msra.mxu0 0
    %230 = vmatpush.bf16.xpose.msra.mxu0 %v151
    %231 = vmatmul.bf16.gmra.mxu0 %v151
    %v232 = vpop.f32.mrf.mxu0
    %v233 = vadd.f32 %v220, %v232
    %v234 = vpop.f32.mrf.mxu0
    %235 = vdwg.mxu0
    %v236 = vmul.f32 %v134, 0.03608439
    %v237 = vmul.f32 %v233, 0.03608439
    %vm238 = vcmask 64512
    %v239 = vsel %vm238, %v236, -inf
    %240 = vmax.xlane.f32.xlu0 %v239
    %v241 = vpop.xlane.xlu0 %240
    %v242 = vsel %vm238, %v237, -inf
    %243 = vmax.xlane.f32.xlu0 %v242
    %v244 = vpop.xlane.xlu0 %243
    %v245 = vsub.f32 %v236, %v241
    %v246 = vsub.f32 %v237, %v244
    %v247 = vmul.f32 %v245, 1.442695
    %v248 = vpow.pop %v247
    %v249 = vmul.f32 %v246, 1.442695
    %v250 = vpow.pop %v249
    %v251 = vsel %vm238, %v248, 0.0
    %252 = vadd.xlane.f32.xlu0 %v251
    %v253 = vpop.xlane.xlu0 %252
    %v254 = vsel %vm238, %v250, 0.0
    %255 = vadd.xlane.f32.xlu0 %v254
    %v256 = vpop.xlane.xlu0 %255
    %v257 = vrcp.pop %v253
    %v258 = vrcp.pop %v256
    %v259 = vmul.f32 %v248, %v257
    %v260 = vmul.f32 %v250, %v258
    %v261 = vpack.c.bf16 %v259, %v259
    %v262 = vpack.c.bf16 %v260, %v260
    %v264 = vsel %vm238, %v261, 0
    %vm266 = vcmask 1043456
    %v268 = vsel %vm266, %v47, 0
    %v271 = vsel %vm266, %v48, 0
    %v274 = vsel %vm266, %v49, 0
    %v277 = vsel %vm266, %v50, 0
    %v280 = vsel %vm266, %v51, 0
    %v283 = vsel %vm266, %v52, 0
    %285 = vmatpush.bf16.msra.mxu0 0
    %286 = vmatpush.bf16.msra.mxu0 0
    %287 = vmatpush.bf16.msra.mxu0 0
    %288 = vmatpush.bf16.msra.mxu0 0
    %289 = vmatpush.bf16.msra.mxu0 0
    %290 = vmatpush.bf16.msra.mxu0 0
    %291 = vmatpush.bf16.msra.mxu0 0
    %292 = vmatpush.bf16.msra.mxu0 %v268
    %293 = vmatmul.bf16.gmra.mxu0 %v264
    %v294 = vpop.f32.mrf.mxu0
    %v295 = vadd.f32 0.0, %v294
    %v296 = vpop.f32.mrf.mxu0
    %297 = vdwg.mxu0
    %298 = vmatpush.bf16.msra.mxu0 0
    %299 = vmatpush.bf16.msra.mxu0 0
    %300 = vmatpush.bf16.msra.mxu0 0
    %301 = vmatpush.bf16.msra.mxu0 0
    %302 = vmatpush.bf16.msra.mxu0 0
    %303 = vmatpush.bf16.msra.mxu0 0
    %304 = vmatpush.bf16.msra.mxu0 0
    %305 = vmatpush.bf16.msra.mxu0 %v271
    %306 = vmatmul.bf16.gmra.mxu0 %v264
    %v307 = vpop.f32.mrf.mxu0
    %v308 = vadd.f32 0.0, %v307
    %v309 = vpop.f32.mrf.mxu0
    %310 = vdwg.mxu0
    %311 = vmatpush.bf16.msra.mxu0 0
    %312 = vmatpush.bf16.msra.mxu0 0
    %313 = vmatpush.bf16.msra.mxu0 0
    %314 = vmatpush.bf16.msra.mxu0 0
    %315 = vmatpush.bf16.msra.mxu0 0
    %316 = vmatpush.bf16.msra.mxu0 0
    %317 = vmatpush.bf16.msra.mxu0 0
    %318 = vmatpush.bf16.msra.mxu0 %v274
    %319 = vmatmul.bf16.gmra.mxu0 %v264
    %v320 = vpop.f32.mrf.mxu0
    %v321 = vadd.f32 0.0, %v320
    %v322 = vpop.f32.mrf.mxu0
    %323 = vdwg.mxu0
    %324 = vmatpush.bf16.msra.mxu0 0
    %325 = vmatpush.bf16.msra.mxu0 0
    %326 = vmatpush.bf16.msra.mxu0 0
    %327 = vmatpush.bf16.msra.mxu0 0
    %328 = vmatpush.bf16.msra.mxu0 0
    %329 = vmatpush.bf16.msra.mxu0 0
    %330 = vmatpush.bf16.msra.mxu0 0
    %331 = vmatpush.bf16.msra.mxu0 %v277
    %332 = vmatmul.bf16.gmra.mxu0 %v264
    %v333 = vpop.f32.mrf.mxu0
    %v334 = vadd.f32 0.0, %v333
    %v335 = vpop.f32.mrf.mxu0
    %336 = vdwg.mxu0
    %337 = vmatpush.bf16.msra.mxu0 0
    %338 = vmatpush.bf16.msra.mxu0 0
    %339 = vmatpush.bf16.msra.mxu0 0
    %340 = vmatpush.bf16.msra.mxu0 0
    %341 = vmatpush.bf16.msra.mxu0 0
    %342 = vmatpush.bf16.msra.mxu0 0
    %343 = vmatpush.bf16.msra.mxu0 0
    %344 = vmatpush.bf16.msra.mxu0 %v280
    %345 = vmatmul.bf16.gmra.mxu0 %v264
    %v346 = vpop.f32.mrf.mxu0
    %v347 = vadd.f32 0.0, %v346
    %v348 = vpop.f32.mrf.mxu0
    %349 = vdwg.mxu0
    %350 = vmatpush.bf16.msra.mxu0 0
    %351 = vmatpush.bf16.msra.mxu0 0
    %352 = vmatpush.bf16.msra.mxu0 0
    %353 = vmatpush.bf16.msra.mxu0 0
    %354 = vmatpush.bf16.msra.mxu0 0
    %355 = vmatpush.bf16.msra.mxu0 0
    %356 = vmatpush.bf16.msra.mxu0 0
    %357 = vmatpush.bf16.msra.mxu0 %v283
    %358 = vmatmul.bf16.gmra.mxu0 %v264
    %v359 = vpop.f32.mrf.mxu0
    %v360 = vadd.f32 0.0, %v359
    %v361 = vpop.f32.mrf.mxu0
    %362 = vdwg.mxu0
    %v364 = vsel %vm238, %v262, 0
    %v367 = vsel %vm266, %v146, 0
    %v370 = vsel %vm266, %v147, 0
    %v373 = vsel %vm266, %v148, 0
    %v376 = vsel %vm266, %v149, 0
    %v379 = vsel %vm266, %v150, 0
    %v382 = vsel %vm266, %v151, 0
    %384 = vmatpush.bf16.msra.mxu0 0
    %385 = vmatpush.bf16.msra.mxu0 0
    %386 = vmatpush.bf16.msra.mxu0 0
    %387 = vmatpush.bf16.msra.mxu0 0
    %388 = vmatpush.bf16.msra.mxu0 0
    %389 = vmatpush.bf16.msra.mxu0 0
    %390 = vmatpush.bf16.msra.mxu0 0
    %391 = vmatpush.bf16.msra.mxu0 %v367
    %392 = vmatmul.bf16.gmra.mxu0 %v364
    %v393 = vpop.f32.mrf.mxu0
    %v394 = vadd.f32 0.0, %v393
    %v395 = vpop.f32.mrf.mxu0
    %396 = vdwg.mxu0
    %397 = vmatpush.bf16.msra.mxu0 0
    %398 = vmatpush.bf16.msra.mxu0 0
    %399 = vmatpush.bf16.msra.mxu0 0
    %400 = vmatpush.bf16.msra.mxu0 0
    %401 = vmatpush.bf16.msra.mxu0 0
    %402 = vmatpush.bf16.msra.mxu0 0
    %403 = vmatpush.bf16.msra.mxu0 0
    %404 = vmatpush.bf16.msra.mxu0 %v370
    %405 = vmatmul.bf16.gmra.mxu0 %v364
    %v406 = vpop.f32.mrf.mxu0
    %v407 = vadd.f32 0.0, %v406
    %v408 = vpop.f32.mrf.mxu0
    %409 = vdwg.mxu0
    %410 = vmatpush.bf16.msra.mxu0 0
    %411 = vmatpush.bf16.msra.mxu0 0
    %412 = vmatpush.bf16.msra.mxu0 0
    %413 = vmatpush.bf16.msra.mxu0 0
    %414 = vmatpush.bf16.msra.mxu0 0
    %415 = vmatpush.bf16.msra.mxu0 0
    %416 = vmatpush.bf16.msra.mxu0 0
    %417 = vmatpush.bf16.msra.mxu0 %v373
    %418 = vmatmul.bf16.gmra.mxu0 %v364
    %v419 = vpop.f32.mrf.mxu0
    %v420 = vadd.f32 0.0, %v419
    %v421 = vpop.f32.mrf.mxu0
    %422 = vdwg.mxu0
    %423 = vmatpush.bf16.msra.mxu0 0
    %424 = vmatpush.bf16.msra.mxu0 0
    %425 = vmatpush.bf16.msra.mxu0 0
    %426 = vmatpush.bf16.msra.mxu0 0
    %427 = vmatpush.bf16.msra.mxu0 0
    %428 = vmatpush.bf16.msra.mxu0 0
    %429 = vmatpush.bf16.msra.mxu0 0
    %430 = vmatpush.bf16.msra.mxu0 %v376
    %431 = vmatmul.bf16.gmra.mxu0 %v364
    %v432 = vpop.f32.mrf.mxu0
    %v433 = vadd.f32 0.0, %v432
    %v434 = vpop.f32.mrf.mxu0
    %435 = vdwg.mxu0
    %436 = vmatpush.bf16.msra.mxu0 0
    %437 = vmatpush.bf16.msra.mxu0 0
    %438 = vmatpush.bf16.msra.mxu0 0
    %439 = vmatpush.bf16.msra.mxu0 0
    %440 = vmatpush.bf16.msra.mxu0 0
    %441 = vmatpush.bf16.msra.mxu0 0
    %442 = vmatpush.bf16.msra.mxu0 0
    %443 = vmatpush.bf16.msra.mxu0 %v379
    %444 = vmatmul.bf16.gmra.mxu0 %v364
    %v445 = vpop.f32.mrf.mxu0
    %v446 = vadd.f32 0.0, %v445
    %v447 = vpop.f32.mrf.mxu0
    %448 = vdwg.mxu0
    %449 = vmatpush.bf16.msra.mxu0 0
    %450 = vmatpush.bf16.msra.mxu0 0
    %451 = vmatpush.bf16.msra.mxu0 0
    %452 = vmatpush.bf16.msra.mxu0 0
    %453 = vmatpush.bf16.msra.mxu0 0
    %454 = vmatpush.bf16.msra.mxu0 0
    %455 = vmatpush.bf16.msra.mxu0 0
    %456 = vmatpush.bf16.msra.mxu0 %v382
    %457 = vmatmul.bf16.gmra.mxu0 %v364
    %v458 = vpop.f32.mrf.mxu0
    %v459 = vadd.f32 0.0, %v458
    %v460 = vpop.f32.mrf.mxu0
    %461 = vdwg.mxu0
    %v462 = vrot.slane %v295, 4
    %v463 = vmax.f32 %v295, %v462
    %v464 = vrot.slane %v463, 2
    %v465 = vmax.f32 %v463, %v464
    %v466 = vrot.slane %v465, 1
    %v467 = vmax.f32 %v465, %v466
    %v468 = vrot.slane %v308, 4
    %v469 = vmax.f32 %v308, %v468
    %v470 = vrot.slane %v469, 2
    %v471 = vmax.f32 %v469, %v470
    %v472 = vrot.slane %v471, 1
    %v473 = vmax.f32 %v471, %v472
    %v474 = vrot.slane %v321, 4
    %v475 = vmax.f32 %v321, %v474
    %v476 = vrot.slane %v475, 2
    %v477 = vmax.f32 %v475, %v476
    %v478 = vrot.slane %v477, 1
    %v479 = vmax.f32 %v477, %v478
    %v480 = vrot.slane %v334, 4
    %v481 = vmax.f32 %v334, %v480
    %v482 = vrot.slane %v481, 2
    %v483 = vmax.f32 %v481, %v482
    %v484 = vrot.slane %v483, 1
    %v485 = vmax.f32 %v483, %v484
    %v486 = vrot.slane %v347, 4
    %v487 = vmax.f32 %v347, %v486
    %v488 = vrot.slane %v487, 2
    %v489 = vmax.f32 %v487, %v488
    %v490 = vrot.slane %v489, 1
    %v491 = vmax.f32 %v489, %v490
    %v492 = vrot.slane %v360, 4
    %v493 = vmax.f32 %v360, %v492
    %v494 = vrot.slane %v493, 2
    %v495 = vmax.f32 %v493, %v494
    %v496 = vrot.slane %v495, 1
    %v497 = vmax.f32 %v495, %v496
    %v498 = vrot.slane %v394, 4
    %v499 = vmax.f32 %v394, %v498
    %v500 = vrot.slane %v499, 2
    %v501 = vmax.f32 %v499, %v500
    %v502 = vrot.slane %v501, 1
    %v503 = vmax.f32 %v501, %v502
    %v504 = vrot.slane %v407, 4
    %v505 = vmax.f32 %v407, %v504
    %v506 = vrot.slane %v505, 2
    %v507 = vmax.f32 %v505, %v506
    %v508 = vrot.slane %v507, 1
    %v509 = vmax.f32 %v507, %v508
    %v510 = vrot.slane %v420, 4
    %v511 = vmax.f32 %v420, %v510
    %v512 = vrot.slane %v511, 2
    %v513 = vmax.f32 %v511, %v512
    %v514 = vrot.slane %v513, 1
    %v515 = vmax.f32 %v513, %v514
    %v516 = vrot.slane %v433, 4
    %v517 = vmax.f32 %v433, %v516
    %v518 = vrot.slane %v517, 2
    %v519 = vmax.f32 %v517, %v518
    %v520 = vrot.slane %v519, 1
    %v521 = vmax.f32 %v519, %v520
    %v522 = vrot.slane %v446, 4
    %v523 = vmax.f32 %v446, %v522
    %v524 = vrot.slane %v523, 2
    %v525 = vmax.f32 %v523, %v524
    %v526 = vrot.slane %v525, 1
    %v527 = vmax.f32 %v525, %v526
    %v528 = vrot.slane %v459, 4
    %v529 = vmax.f32 %v459, %v528
    %v530 = vrot.slane %v529, 2
    %v531 = vmax.f32 %v529, %v530
    %v532 = vrot.slane %v531, 1
    %v533 = vmax.f32 %v531, %v532
    %v534 = vpack.c.bf16 %v467, %v467
    %v535 = vpack.c.bf16 %v473, %v473
    %v536 = vpack.c.bf16 %v479, %v479
    %v537 = vpack.c.bf16 %v485, %v485
    %v538 = vpack.c.bf16 %v491, %v491
    %v539 = vpack.c.bf16 %v497, %v497
    %v540 = vpack.c.bf16 %v503, %v503
    %v541 = vpack.c.bf16 %v509, %v509
    %v542 = vpack.c.bf16 %v515, %v515
    %v543 = vpack.c.bf16 %v521, %v521
    %v544 = vpack.c.bf16 %v527, %v527
    %v545 = vpack.c.bf16 %v533, %v533
    %v546 = vld [vmem:[#allocation2] sm:$0xff]
    %v547 = vld [vmem:[#allocation2 + $0x8] sm:$0xff]
    %v548 = vld [vmem:[#allocation2 + $0x10] sm:$0xff]
    %v549 = vld [vmem:[#allocation2 + $0x18] sm:$0xff]
    %v550 = vld [vmem:[#allocation2 + $0x20] sm:$0xff]
    %v551 = vld [vmem:[#allocation2 + $0x28] sm:$0xff]
    %v552 = vld [vmem:[#allocation2 + $0x30] sm:$0xff]
    %v553 = vld [vmem:[#allocation2 + $0x38] sm:$0xff]
    %v554 = vld [vmem:[#allocation2 + $0x40] sm:$0xff]
    %v555 = vld [vmem:[#allocation2 + $0x48] sm:$0xff]
    %v556 = vld [vmem:[#allocation2 + $0x50] sm:$0xff]
    %v557 = vld [vmem:[#allocation2 + $0x58] sm:$0xff]
    %v558 = vld [vmem:[#allocation2 + $0x60] sm:$0xff]
    %v559 = vld [vmem:[#allocation2 + $0x68] sm:$0xff]
    %v560 = vld [vmem:[#allocation2 + $0x70] sm:$0xff]
    %v561 = vld [vmem:[#allocation2 + $0x78] sm:$0xff]
    %v562 = vld [vmem:[#allocation2 + $0x80] sm:$0xff]
    %v563 = vld [vmem:[#allocation2 + $0x88] sm:$0xff]
    %v564 = vld [vmem:[#allocation2 + $0x90] sm:$0xff]
    %v565 = vld [vmem:[#allocation2 + $0x98] sm:$0xff]
    %v566 = vld [vmem:[#allocation2 + $0xa0] sm:$0xff]
    %v567 = vld [vmem:[#allocation2 + $0xa8] sm:$0xff]
    %v568 = vld [vmem:[#allocation2 + $0xb0] sm:$0xff]
    %v569 = vld [vmem:[#allocation2 + $0xb8] sm:$0xff]
    %v570 = vld [vmem:[#allocation2 + $0xc0] sm:$0xff]
    %v571 = vld [vmem:[#allocation2 + $0xc8] sm:$0xff]
    %v572 = vld [vmem:[#allocation2 + $0xd0] sm:$0xff]
    %v573 = vld [vmem:[#allocation2 + $0xd8] sm:$0xff]
    %v574 = vld [vmem:[#allocation2 + $0xe0] sm:$0xff]
    %v575 = vld [vmem:[#allocation2 + $0xe8] sm:$0xff]
    %v576 = vld [vmem:[#allocation2 + $0xf0] sm:$0xff]
    %v577 = vld [vmem:[#allocation2 + $0xf8] sm:$0xff]
    %v578 = vld [vmem:[#allocation2 + $0x100] sm:$0xff]
    %v579 = vld [vmem:[#allocation2 + $0x108] sm:$0xff]
    %v580 = vld [vmem:[#allocation2 + $0x110] sm:$0xff]
    %v581 = vld [vmem:[#allocation2 + $0x118] sm:$0xff]
    %v582 = vld [vmem:[#allocation2 + $0x120] sm:$0xff]
    %v583 = vld [vmem:[#allocation2 + $0x128] sm:$0xff]
    %v584 = vld [vmem:[#allocation2 + $0x130] sm:$0xff]
    %v585 = vld [vmem:[#allocation2 + $0x138] sm:$0xff]
    %v586 = vld [vmem:[#allocation2 + $0x140] sm:$0xff]
    %v587 = vld [vmem:[#allocation2 + $0x148] sm:$0xff]
    %v588 = vld [vmem:[#allocation2 + $0x150] sm:$0xff]
    %v589 = vld [vmem:[#allocation2 + $0x158] sm:$0xff]
    %v590 = vld [vmem:[#allocation2 + $0x160] sm:$0xff]
    %v591 = vld [vmem:[#allocation2 + $0x168] sm:$0xff]
    %v592 = vld [vmem:[#allocation2 + $0x170] sm:$0xff]
    %v593 = vld [vmem:[#allocation2 + $0x178] sm:$0xff]
    %v594 = vld [vmem:[#allocation2 + $0x180] sm:$0xff]
    %v595 = vld [vmem:[#allocation2 + $0x188] sm:$0xff]
    %v596 = vld [vmem:[#allocation2 + $0x190] sm:$0xff]
    %v597 = vld [vmem:[#allocation2 + $0x198] sm:$0xff]
    %v598 = vld [vmem:[#allocation2 + $0x1a0] sm:$0xff]
    %v599 = vld [vmem:[#allocation2 + $0x1a8] sm:$0xff]
    %v600 = vld [vmem:[#allocation2 + $0x1b0] sm:$0xff]
    %v601 = vld [vmem:[#allocation2 + $0x1b8] sm:$0xff]
    %v602 = vld [vmem:[#allocation2 + $0x1c0] sm:$0xff]
    %v603 = vld [vmem:[#allocation2 + $0x1c8] sm:$0xff]
    %v604 = vld [vmem:[#allocation2 + $0x1d0] sm:$0xff]
    %v605 = vld [vmem:[#allocation2 + $0x1d8] sm:$0xff]
    %v606 = vld [vmem:[#allocation2 + $0x1e0] sm:$0xff]
    %v607 = vld [vmem:[#allocation2 + $0x1e8] sm:$0xff]
    %v608 = vld [vmem:[#allocation2 + $0x1f0] sm:$0xff]
    %v609 = vld [vmem:[#allocation2 + $0x1f8] sm:$0xff]
    %v610 = vld [vmem:[#allocation2 + $0x200] sm:$0xff]
    %v611 = vld [vmem:[#allocation2 + $0x208] sm:$0xff]
    %v612 = vld [vmem:[#allocation2 + $0x210] sm:$0xff]
    %v613 = vld [vmem:[#allocation2 + $0x218] sm:$0xff]
    %v614 = vld [vmem:[#allocation2 + $0x220] sm:$0xff]
    %v615 = vld [vmem:[#allocation2 + $0x228] sm:$0xff]
    %v616 = vld [vmem:[#allocation2 + $0x230] sm:$0xff]
    %v617 = vld [vmem:[#allocation2 + $0x238] sm:$0xff]
    %v618 = vld [vmem:[#allocation2 + $0x240] sm:$0xff]
    %v619 = vld [vmem:[#allocation2 + $0x248] sm:$0xff]
    %v620 = vld [vmem:[#allocation2 + $0x250] sm:$0xff]
    %v621 = vld [vmem:[#allocation2 + $0x258] sm:$0xff]
    %v622 = vld [vmem:[#allocation2 + $0x260] sm:$0xff]
    %v623 = vld [vmem:[#allocation2 + $0x268] sm:$0xff]
    %v624 = vld [vmem:[#allocation2 + $0x270] sm:$0xff]
    %v625 = vld [vmem:[#allocation2 + $0x278] sm:$0xff]
    %v626 = vld [vmem:[#allocation2 + $0x280] sm:$0xff]
    %v627 = vld [vmem:[#allocation2 + $0x288] sm:$0xff]
    %v628 = vld [vmem:[#allocation2 + $0x290] sm:$0xff]
    %v629 = vld [vmem:[#allocation2 + $0x298] sm:$0xff]
    %v630 = vld [vmem:[#allocation2 + $0x2a0] sm:$0xff]
    %v631 = vld [vmem:[#allocation2 + $0x2a8] sm:$0xff]
    %v632 = vld [vmem:[#allocation2 + $0x2b0] sm:$0xff]
    %v633 = vld [vmem:[#allocation2 + $0x2b8] sm:$0xff]
    %v634 = vld [vmem:[#allocation2 + $0x2c0] sm:$0xff]
    %v635 = vld [vmem:[#allocation2 + $0x2c8] sm:$0xff]
    %v636 = vld [vmem:[#allocation2 + $0x2d0] sm:$0xff]
    %v637 = vld [vmem:[#allocation2 + $0x2d8] sm:$0xff]
    %v638 = vld [vmem:[#allocation2 + $0x2e0] sm:$0xff]
    %v639 = vld [vmem:[#allocation2 + $0x2e8] sm:$0xff]
    %v640 = vld [vmem:[#allocation2 + $0x2f0] sm:$0xff]
    %v641 = vld [vmem:[#allocation2 + $0x2f8] sm:$0xff]
    %v642 = vld [vmem:[#allocation2 + $0x300] sm:$0xff]
    %v643 = vld [vmem:[#allocation2 + $0x308] sm:$0xff]
    %v644 = vld [vmem:[#allocation2 + $0x310] sm:$0xff]
    %v645 = vld [vmem:[#allocation2 + $0x318] sm:$0xff]
    %v646 = vld [vmem:[#allocation2 + $0x320] sm:$0xff]
    %v647 = vld [vmem:[#allocation2 + $0x328] sm:$0xff]
    %v648 = vld [vmem:[#allocation2 + $0x330] sm:$0xff]
    %v649 = vld [vmem:[#allocation2 + $0x338] sm:$0xff]
    %v650 = vld [vmem:[#allocation2 + $0x340] sm:$0xff]
    %v651 = vld [vmem:[#allocation2 + $0x348] sm:$0xff]
    %v652 = vld [vmem:[#allocation2 + $0x350] sm:$0xff]
    %v653 = vld [vmem:[#allocation2 + $0x358] sm:$0xff]
    %v654 = vld [vmem:[#allocation2 + $0x360] sm:$0xff]
    %v655 = vld [vmem:[#allocation2 + $0x368] sm:$0xff]
    %v656 = vld [vmem:[#allocation2 + $0x370] sm:$0xff]
    %v657 = vld [vmem:[#allocation2 + $0x378] sm:$0xff]
    %v658 = vld [vmem:[#allocation2 + $0x380] sm:$0xff]
    %v659 = vld [vmem:[#allocation2 + $0x388] sm:$0xff]
    %v660 = vld [vmem:[#allocation2 + $0x390] sm:$0xff]
    %v661 = vld [vmem:[#allocation2 + $0x398] sm:$0xff]
    %v662 = vld [vmem:[#allocation2 + $0x3a0] sm:$0xff]
    %v663 = vld [vmem:[#allocation2 + $0x3a8] sm:$0xff]
    %v664 = vld [vmem:[#allocation2 + $0x3b0] sm:$0xff]
    %v665 = vld [vmem:[#allocation2 + $0x3b8] sm:$0xff]
    %v666 = vld [vmem:[#allocation2 + $0x3c0] sm:$0xff]
    %v667 = vld [vmem:[#allocation2 + $0x3c8] sm:$0xff]
    %v668 = vld [vmem:[#allocation2 + $0x3d0] sm:$0xff]
    %v669 = vld [vmem:[#allocation2 + $0x3d8] sm:$0xff]
    %v670 = vld [vmem:[#allocation2 + $0x3e0] sm:$0xff]
    %v671 = vld [vmem:[#allocation2 + $0x3e8] sm:$0xff]
    %v672 = vld [vmem:[#allocation2 + $0x3f0] sm:$0xff]
    %v673 = vld [vmem:[#allocation2 + $0x3f8] sm:$0xff]
    %v674 = vld [vmem:[#allocation2 + $0x400] sm:$0xff]
    %v675 = vld [vmem:[#allocation2 + $0x408] sm:$0xff]
    %v676 = vld [vmem:[#allocation2 + $0x410] sm:$0xff]
    %v677 = vld [vmem:[#allocation2 + $0x418] sm:$0xff]
    %v678 = vld [vmem:[#allocation2 + $0x420] sm:$0xff]
    %v679 = vld [vmem:[#allocation2 + $0x428] sm:$0xff]
    %v680 = vld [vmem:[#allocation2 + $0x430] sm:$0xff]
    %v681 = vld [vmem:[#allocation2 + $0x438] sm:$0xff]
    %v682 = vld [vmem:[#allocation2 + $0x440] sm:$0xff]
    %v683 = vld [vmem:[#allocation2 + $0x448] sm:$0xff]
    %v684 = vld [vmem:[#allocation2 + $0x450] sm:$0xff]
    %v685 = vld [vmem:[#allocation2 + $0x458] sm:$0xff]
    %v686 = vld [vmem:[#allocation2 + $0x460] sm:$0xff]
    %v687 = vld [vmem:[#allocation2 + $0x468] sm:$0xff]
    %v688 = vld [vmem:[#allocation2 + $0x470] sm:$0xff]
    %v689 = vld [vmem:[#allocation2 + $0x478] sm:$0xff]
    %v690 = vld [vmem:[#allocation2 + $0x480] sm:$0xff]
    %v691 = vld [vmem:[#allocation2 + $0x488] sm:$0xff]
    %v692 = vld [vmem:[#allocation2 + $0x490] sm:$0xff]
    %v693 = vld [vmem:[#allocation2 + $0x498] sm:$0xff]
    %v694 = vld [vmem:[#allocation2 + $0x4a0] sm:$0xff]
    %v695 = vld [vmem:[#allocation2 + $0x4a8] sm:$0xff]
    %v696 = vld [vmem:[#allocation2 + $0x4b0] sm:$0xff]
    %v697 = vld [vmem:[#allocation2 + $0x4b8] sm:$0xff]
    %v698 = vld [vmem:[#allocation2 + $0x4c0] sm:$0xff]
    %v699 = vld [vmem:[#allocation2 + $0x4c8] sm:$0xff]
    %v700 = vld [vmem:[#allocation2 + $0x4d0] sm:$0xff]
    %v701 = vld [vmem:[#allocation2 + $0x4d8] sm:$0xff]
    %v702 = vld [vmem:[#allocation2 + $0x4e0] sm:$0xff]
    %v703 = vld [vmem:[#allocation2 + $0x4e8] sm:$0xff]
    %v704 = vld [vmem:[#allocation2 + $0x4f0] sm:$0xff]
    %v705 = vld [vmem:[#allocation2 + $0x4f8] sm:$0xff]
    %v706 = vld [vmem:[#allocation2 + $0x500] sm:$0xff]
    %v707 = vld [vmem:[#allocation2 + $0x508] sm:$0xff]
    %v708 = vld [vmem:[#allocation2 + $0x510] sm:$0xff]
    %v709 = vld [vmem:[#allocation2 + $0x518] sm:$0xff]
    %v710 = vld [vmem:[#allocation2 + $0x520] sm:$0xff]
    %v711 = vld [vmem:[#allocation2 + $0x528] sm:$0xff]
    %v712 = vld [vmem:[#allocation2 + $0x530] sm:$0xff]
    %v713 = vld [vmem:[#allocation2 + $0x538] sm:$0xff]
    %v714 = vld [vmem:[#allocation2 + $0x540] sm:$0xff]
    %v715 = vld [vmem:[#allocation2 + $0x548] sm:$0xff]
    %v716 = vld [vmem:[#allocation2 + $0x550] sm:$0xff]
    %v717 = vld [vmem:[#allocation2 + $0x558] sm:$0xff]
    %v718 = vld [vmem:[#allocation2 + $0x560] sm:$0xff]
    %v719 = vld [vmem:[#allocation2 + $0x568] sm:$0xff]
    %v720 = vld [vmem:[#allocation2 + $0x570] sm:$0xff]
    %v721 = vld [vmem:[#allocation2 + $0x578] sm:$0xff]
    %v722 = vld [vmem:[#allocation2 + $0x580] sm:$0xff]
    %v723 = vld [vmem:[#allocation2 + $0x588] sm:$0xff]
    %v724 = vld [vmem:[#allocation2 + $0x590] sm:$0xff]
    %v725 = vld [vmem:[#allocation2 + $0x598] sm:$0xff]
    %v726 = vld [vmem:[#allocation2 + $0x5a0] sm:$0xff]
    %v727 = vld [vmem:[#allocation2 + $0x5a8] sm:$0xff]
    %v728 = vld [vmem:[#allocation2 + $0x5b0] sm:$0xff]
    %v729 = vld [vmem:[#allocation2 + $0x5b8] sm:$0xff]
    %v730 = vld [vmem:[#allocation2 + $0x5c0] sm:$0xff]
    %v731 = vld [vmem:[#allocation2 + $0x5c8] sm:$0xff]
    %v732 = vld [vmem:[#allocation2 + $0x5d0] sm:$0xff]
    %v733 = vld [vmem:[#allocation2 + $0x5d8] sm:$0xff]
    %v734 = vld [vmem:[#allocation2 + $0x5e0] sm:$0xff]
    %v735 = vld [vmem:[#allocation2 + $0x5e8] sm:$0xff]
    %v736 = vld [vmem:[#allocation2 + $0x5f0] sm:$0xff]
    %v737 = vld [vmem:[#allocation2 + $0x5f8] sm:$0xff]
    %v738 = vld [vmem:[%s2] sm:$0xf]
    %v740 = vperm.slane %v738, 0
    %v741 = vperm.slane %v738, 1
    %v742 = vperm.slane %v738, 2
    %v743 = vperm.slane %v738, 3
    %v760 = vunpack.c.l.b16 %v534
    %v761 = vunpack.c.l.b16 %v535
    %v762 = vunpack.c.l.b16 %v536
    %v763 = vunpack.c.l.b16 %v537
    %v764 = vunpack.c.l.b16 %v538
    %v765 = vunpack.c.l.b16 %v539
    %v766 = vunpack.c.l.b16 %v540
    %v767 = vunpack.c.l.b16 %v541
    %v768 = vunpack.c.l.b16 %v542
    %v769 = vunpack.c.l.b16 %v543
    %v770 = vunpack.c.l.b16 %v544
    %v771 = vunpack.c.l.b16 %v545
    %vm772 = vcmask 1041409
    %v773 = vsel %vm772, %v766, %v760
    %v774 = vsel %vm772, %v767, %v761
    %v775 = vsel %vm772, %v768, %v762
    %v776 = vsel %vm772, %v769, %v763
    %v777 = vsel %vm772, %v770, %v764
    %v778 = vsel %vm772, %v771, %v765
    %v779 = vpack.c.b16 %v773, %v773
    %v780 = vpack.c.b16 %v774, %v774
    %v781 = vpack.c.b16 %v775, %v775
    %v782 = vpack.c.b16 %v776, %v776
    %v783 = vpack.c.b16 %v777, %v777
    %v784 = vpack.c.b16 %v778, %v778
    %v983 = vunpack.c.l.b16 %v546
    %v984 = vunpack.c.h.b16 %v546
    %v985 = vunpack.c.l.b16 %v547
    %v986 = vunpack.c.h.b16 %v547
    %v987 = vunpack.c.l.b16 %v548
    %v988 = vunpack.c.h.b16 %v548
    %v989 = vunpack.c.l.b16 %v549
    %v990 = vunpack.c.h.b16 %v549
    %v991 = vunpack.c.l.b16 %v550
    %v992 = vunpack.c.h.b16 %v550
    %v993 = vunpack.c.l.b16 %v551
    %v994 = vunpack.c.h.b16 %v551
    %v995 = vunpack.c.l.b16 %v552
    %v996 = vunpack.c.h.b16 %v552
    %v997 = vunpack.c.l.b16 %v553
    %v998 = vunpack.c.h.b16 %v553
    %v999 = vunpack.c.l.b16 %v554
    %v1000 = vunpack.c.h.b16 %v554
    %v1001 = vunpack.c.l.b16 %v555
    %v1002 = vunpack.c.h.b16 %v555
    %v1003 = vunpack.c.l.b16 %v556
    %v1004 = vunpack.c.h.b16 %v556
    %v1005 = vunpack.c.l.b16 %v557
    %v1006 = vunpack.c.h.b16 %v557
    %v1007 = vunpack.c.l.b16 %v558
    %v1008 = vunpack.c.h.b16 %v558
    %v1009 = vunpack.c.l.b16 %v559
    %v1010 = vunpack.c.h.b16 %v559
    %v1011 = vunpack.c.l.b16 %v560
    %v1012 = vunpack.c.h.b16 %v560
    %v1013 = vunpack.c.l.b16 %v561
    %v1014 = vunpack.c.h.b16 %v561
    %v1015 = vunpack.c.l.b16 %v562
    %v1016 = vunpack.c.h.b16 %v562
    %v1017 = vunpack.c.l.b16 %v563
    %v1018 = vunpack.c.h.b16 %v563
    %v1019 = vunpack.c.l.b16 %v564
    %v1020 = vunpack.c.h.b16 %v564
    %v1021 = vunpack.c.l.b16 %v565
    %v1022 = vunpack.c.h.b16 %v565
    %v1023 = vunpack.c.l.b16 %v566
    %v1024 = vunpack.c.h.b16 %v566
    %v1025 = vunpack.c.l.b16 %v567
    %v1026 = vunpack.c.h.b16 %v567
    %v1027 = vunpack.c.l.b16 %v568
    %v1028 = vunpack.c.h.b16 %v568
    %v1029 = vunpack.c.l.b16 %v569
    %v1030 = vunpack.c.h.b16 %v569
    %v1031 = vunpack.c.l.b16 %v570
    %v1032 = vunpack.c.h.b16 %v570
    %v1033 = vunpack.c.l.b16 %v571
    %v1034 = vunpack.c.h.b16 %v571
    %v1035 = vunpack.c.l.b16 %v572
    %v1036 = vunpack.c.h.b16 %v572
    %v1037 = vunpack.c.l.b16 %v573
    %v1038 = vunpack.c.h.b16 %v573
    %v1039 = vunpack.c.l.b16 %v574
    %v1040 = vunpack.c.h.b16 %v574
    %v1041 = vunpack.c.l.b16 %v575
    %v1042 = vunpack.c.h.b16 %v575
    %v1043 = vunpack.c.l.b16 %v576
    %v1044 = vunpack.c.h.b16 %v576
    %v1045 = vunpack.c.l.b16 %v577
    %v1046 = vunpack.c.h.b16 %v577
    %v1047 = vunpack.c.l.b16 %v578
    %v1048 = vunpack.c.h.b16 %v578
    %v1049 = vunpack.c.l.b16 %v579
    %v1050 = vunpack.c.h.b16 %v579
    %v1051 = vunpack.c.l.b16 %v580
    %v1052 = vunpack.c.h.b16 %v580
    %v1053 = vunpack.c.l.b16 %v581
    %v1054 = vunpack.c.h.b16 %v581
    %v1055 = vunpack.c.l.b16 %v582
    %v1056 = vunpack.c.h.b16 %v582
    %v1057 = vunpack.c.l.b16 %v583
    %v1058 = vunpack.c.h.b16 %v583
    %v1059 = vunpack.c.l.b16 %v584
    %v1060 = vunpack.c.h.b16 %v584
    %v1061 = vunpack.c.l.b16 %v585
    %v1062 = vunpack.c.h.b16 %v585
    %v1063 = vunpack.c.l.b16 %v586
    %v1064 = vunpack.c.h.b16 %v586
    %v1065 = vunpack.c.l.b16 %v587
    %v1066 = vunpack.c.h.b16 %v587
    %v1067 = vunpack.c.l.b16 %v588
    %v1068 = vunpack.c.h.b16 %v588
    %v1069 = vunpack.c.l.b16 %v589
    %v1070 = vunpack.c.h.b16 %v589
    %v1071 = vunpack.c.l.b16 %v590
    %v1072 = vunpack.c.h.b16 %v590
    %v1073 = vunpack.c.l.b16 %v591
    %v1074 = vunpack.c.h.b16 %v591
    %v1075 = vunpack.c.l.b16 %v592
    %v1076 = vunpack.c.h.b16 %v592
    %v1077 = vunpack.c.l.b16 %v593
    %v1078 = vunpack.c.h.b16 %v593
    %v1079 = vunpack.c.l.b16 %v594
    %v1080 = vunpack.c.h.b16 %v594
    %v1081 = vunpack.c.l.b16 %v595
    %v1082 = vunpack.c.h.b16 %v595
    %v1083 = vunpack.c.l.b16 %v596
    %v1084 = vunpack.c.h.b16 %v596
    %v1085 = vunpack.c.l.b16 %v597
    %v1086 = vunpack.c.h.b16 %v597
    %v1087 = vunpack.c.l.b16 %v598
    %v1088 = vunpack.c.h.b16 %v598
    %v1089 = vunpack.c.l.b16 %v599
    %v1090 = vunpack.c.h.b16 %v599
    %v1091 = vunpack.c.l.b16 %v600
    %v1092 = vunpack.c.h.b16 %v600
    %v1093 = vunpack.c.l.b16 %v601
    %v1094 = vunpack.c.h.b16 %v601
    %v1095 = vunpack.c.l.b16 %v602
    %v1096 = vunpack.c.h.b16 %v602
    %v1097 = vunpack.c.l.b16 %v603
    %v1098 = vunpack.c.h.b16 %v603
    %v1099 = vunpack.c.l.b16 %v604
    %v1100 = vunpack.c.h.b16 %v604
    %v1101 = vunpack.c.l.b16 %v605
    %v1102 = vunpack.c.h.b16 %v605
    %v1103 = vunpack.c.l.b16 %v606
    %v1104 = vunpack.c.h.b16 %v606
    %v1105 = vunpack.c.l.b16 %v607
    %v1106 = vunpack.c.h.b16 %v607
    %v1107 = vunpack.c.l.b16 %v608
    %v1108 = vunpack.c.h.b16 %v608
    %v1109 = vunpack.c.l.b16 %v609
    %v1110 = vunpack.c.h.b16 %v609
    %v1111 = vunpack.c.l.b16 %v610
    %v1112 = vunpack.c.h.b16 %v610
    %v1113 = vunpack.c.l.b16 %v611
    %v1114 = vunpack.c.h.b16 %v611
    %v1115 = vunpack.c.l.b16 %v612
    %v1116 = vunpack.c.h.b16 %v612
    %v1117 = vunpack.c.l.b16 %v613
    %v1118 = vunpack.c.h.b16 %v613
    %v1119 = vunpack.c.l.b16 %v614
    %v1120 = vunpack.c.h.b16 %v614
    %v1121 = vunpack.c.l.b16 %v615
    %v1122 = vunpack.c.h.b16 %v615
    %v1123 = vunpack.c.l.b16 %v616
    %v1124 = vunpack.c.h.b16 %v616
    %v1125 = vunpack.c.l.b16 %v617
    %v1126 = vunpack.c.h.b16 %v617
    %v1127 = vunpack.c.l.b16 %v618
    %v1128 = vunpack.c.h.b16 %v618
    %v1129 = vunpack.c.l.b16 %v619
    %v1130 = vunpack.c.h.b16 %v619
    %v1131 = vunpack.c.l.b16 %v620
    %v1132 = vunpack.c.h.b16 %v620
    %v1133 = vunpack.c.l.b16 %v621
    %v1134 = vunpack.c.h.b16 %v621
    %v1135 = vunpack.c.l.b16 %v622
    %v1136 = vunpack.c.h.b16 %v622
    %v1137 = vunpack.c.l.b16 %v623
    %v1138 = vunpack.c.h.b16 %v623
    %v1139 = vunpack.c.l.b16 %v624
    %v1140 = vunpack.c.h.b16 %v624
    %v1141 = vunpack.c.l.b16 %v625
    %v1142 = vunpack.c.h.b16 %v625
    %v1143 = vunpack.c.l.b16 %v626
    %v1144 = vunpack.c.h.b16 %v626
    %v1145 = vunpack.c.l.b16 %v627
    %v1146 = vunpack.c.h.b16 %v627
    %v1147 = vunpack.c.l.b16 %v628
    %v1148 = vunpack.c.h.b16 %v628
    %v1149 = vunpack.c.l.b16 %v629
    %v1150 = vunpack.c.h.b16 %v629
    %v1151 = vunpack.c.l.b16 %v630
    %v1152 = vunpack.c.h.b16 %v630
    %v1153 = vunpack.c.l.b16 %v631
    %v1154 = vunpack.c.h.b16 %v631
    %v1155 = vunpack.c.l.b16 %v632
    %v1156 = vunpack.c.h.b16 %v632
    %v1157 = vunpack.c.l.b16 %v633
    %v1158 = vunpack.c.h.b16 %v633
    %v1159 = vunpack.c.l.b16 %v634
    %v1160 = vunpack.c.h.b16 %v634
    %v1161 = vunpack.c.l.b16 %v635
    %v1162 = vunpack.c.h.b16 %v635
    %v1163 = vunpack.c.l.b16 %v636
    %v1164 = vunpack.c.h.b16 %v636
    %v1165 = vunpack.c.l.b16 %v637
    %v1166 = vunpack.c.h.b16 %v637
    %v1167 = vunpack.c.l.b16 %v638
    %v1168 = vunpack.c.h.b16 %v638
    %v1169 = vunpack.c.l.b16 %v639
    %v1170 = vunpack.c.h.b16 %v639
    %v1171 = vunpack.c.l.b16 %v640
    %v1172 = vunpack.c.h.b16 %v640
    %v1173 = vunpack.c.l.b16 %v641
    %v1174 = vunpack.c.h.b16 %v641
    %v1175 = vunpack.c.l.b16 %v642
    %v1176 = vunpack.c.h.b16 %v642
    %v1177 = vunpack.c.l.b16 %v643
    %v1178 = vunpack.c.h.b16 %v643
    %v1179 = vunpack.c.l.b16 %v644
    %v1180 = vunpack.c.h.b16 %v644
    %v1181 = vunpack.c.l.b16 %v645
    %v1182 = vunpack.c.h.b16 %v645
    %v1183 = vunpack.c.l.b16 %v646
    %v1184 = vunpack.c.h.b16 %v646
    %v1185 = vunpack.c.l.b16 %v647
    %v1186 = vunpack.c.h.b16 %v647
    %v1187 = vunpack.c.l.b16 %v648
    %v1188 = vunpack.c.h.b16 %v648
    %v1189 = vunpack.c.l.b16 %v649
    %v1190 = vunpack.c.h.b16 %v649
    %v1191 = vunpack.c.l.b16 %v650
    %v1192 = vunpack.c.h.b16 %v650
    %v1193 = vunpack.c.l.b16 %v651
    %v1194 = vunpack.c.h.b16 %v651
    %v1195 = vunpack.c.l.b16 %v652
    %v1196 = vunpack.c.h.b16 %v652
    %v1197 = vunpack.c.l.b16 %v653
    %v1198 = vunpack.c.h.b16 %v653
    %v1199 = vunpack.c.l.b16 %v654
    %v1200 = vunpack.c.h.b16 %v654
    %v1201 = vunpack.c.l.b16 %v655
    %v1202 = vunpack.c.h.b16 %v655
    %v1203 = vunpack.c.l.b16 %v656
    %v1204 = vunpack.c.h.b16 %v656
    %v1205 = vunpack.c.l.b16 %v657
    %v1206 = vunpack.c.h.b16 %v657
    %v1207 = vunpack.c.l.b16 %v658
    %v1208 = vunpack.c.h.b16 %v658
    %v1209 = vunpack.c.l.b16 %v659
    %v1210 = vunpack.c.h.b16 %v659
    %v1211 = vunpack.c.l.b16 %v660
    %v1212 = vunpack.c.h.b16 %v660
    %v1213 = vunpack.c.l.b16 %v661
    %v1214 = vunpack.c.h.b16 %v661
    %v1215 = vunpack.c.l.b16 %v662
    %v1216 = vunpack.c.h.b16 %v662
    %v1217 = vunpack.c.l.b16 %v663
    %v1218 = vunpack.c.h.b16 %v663
    %v1219 = vunpack.c.l.b16 %v664
    %v1220 = vunpack.c.h.b16 %v664
    %v1221 = vunpack.c.l.b16 %v665
    %v1222 = vunpack.c.h.b16 %v665
    %v1223 = vunpack.c.l.b16 %v666
    %v1224 = vunpack.c.h.b16 %v666
    %v1225 = vunpack.c.l.b16 %v667
    %v1226 = vunpack.c.h.b16 %v667
    %v1227 = vunpack.c.l.b16 %v668
    %v1228 = vunpack.c.h.b16 %v668
    %v1229 = vunpack.c.l.b16 %v669
    %v1230 = vunpack.c.h.b16 %v669
    %v1231 = vunpack.c.l.b16 %v670
    %v1232 = vunpack.c.h.b16 %v670
    %v1233 = vunpack.c.l.b16 %v671
    %v1234 = vunpack.c.h.b16 %v671
    %v1235 = vunpack.c.l.b16 %v672
    %v1236 = vunpack.c.h.b16 %v672
    %v1237 = vunpack.c.l.b16 %v673
    %v1238 = vunpack.c.h.b16 %v673
    %v1239 = vunpack.c.l.b16 %v674
    %v1240 = vunpack.c.h.b16 %v674
    %v1241 = vunpack.c.l.b16 %v675
    %v1242 = vunpack.c.h.b16 %v675
    %v1243 = vunpack.c.l.b16 %v676
    %v1244 = vunpack.c.h.b16 %v676
    %v1245 = vunpack.c.l.b16 %v677
    %v1246 = vunpack.c.h.b16 %v677
    %v1247 = vunpack.c.l.b16 %v678
    %v1248 = vunpack.c.h.b16 %v678
    %v1249 = vunpack.c.l.b16 %v679
    %v1250 = vunpack.c.h.b16 %v679
    %v1251 = vunpack.c.l.b16 %v680
    %v1252 = vunpack.c.h.b16 %v680
    %v1253 = vunpack.c.l.b16 %v681
    %v1254 = vunpack.c.h.b16 %v681
    %v1255 = vunpack.c.l.b16 %v682
    %v1256 = vunpack.c.h.b16 %v682
    %v1257 = vunpack.c.l.b16 %v683
    %v1258 = vunpack.c.h.b16 %v683
    %v1259 = vunpack.c.l.b16 %v684
    %v1260 = vunpack.c.h.b16 %v684
    %v1261 = vunpack.c.l.b16 %v685
    %v1262 = vunpack.c.h.b16 %v685
    %v1263 = vunpack.c.l.b16 %v686
    %v1264 = vunpack.c.h.b16 %v686
    %v1265 = vunpack.c.l.b16 %v687
    %v1266 = vunpack.c.h.b16 %v687
    %v1267 = vunpack.c.l.b16 %v688
    %v1268 = vunpack.c.h.b16 %v688
    %v1269 = vunpack.c.l.b16 %v689
    %v1270 = vunpack.c.h.b16 %v689
    %v1271 = vunpack.c.l.b16 %v690
    %v1272 = vunpack.c.h.b16 %v690
    %v1273 = vunpack.c.l.b16 %v691
    %v1274 = vunpack.c.h.b16 %v691
    %v1275 = vunpack.c.l.b16 %v692
    %v1276 = vunpack.c.h.b16 %v692
    %v1277 = vunpack.c.l.b16 %v693
    %v1278 = vunpack.c.h.b16 %v693
    %v1279 = vunpack.c.l.b16 %v694
    %v1280 = vunpack.c.h.b16 %v694
    %v1281 = vunpack.c.l.b16 %v695
    %v1282 = vunpack.c.h.b16 %v695
    %v1283 = vunpack.c.l.b16 %v696
    %v1284 = vunpack.c.h.b16 %v696
    %v1285 = vunpack.c.l.b16 %v697
    %v1286 = vunpack.c.h.b16 %v697
    %v1287 = vunpack.c.l.b16 %v698
    %v1288 = vunpack.c.h.b16 %v698
    %v1289 = vunpack.c.l.b16 %v699
    %v1290 = vunpack.c.h.b16 %v699
    %v1291 = vunpack.c.l.b16 %v700
    %v1292 = vunpack.c.h.b16 %v700
    %v1293 = vunpack.c.l.b16 %v701
    %v1294 = vunpack.c.h.b16 %v701
    %v1295 = vunpack.c.l.b16 %v702
    %v1296 = vunpack.c.h.b16 %v702
    %v1297 = vunpack.c.l.b16 %v703
    %v1298 = vunpack.c.h.b16 %v703
    %v1299 = vunpack.c.l.b16 %v704
    %v1300 = vunpack.c.h.b16 %v704
    %v1301 = vunpack.c.l.b16 %v705
    %v1302 = vunpack.c.h.b16 %v705
    %v1303 = vunpack.c.l.b16 %v706
    %v1304 = vunpack.c.h.b16 %v706
    %v1305 = vunpack.c.l.b16 %v707
    %v1306 = vunpack.c.h.b16 %v707
    %v1307 = vunpack.c.l.b16 %v708
    %v1308 = vunpack.c.h.b16 %v708
    %v1309 = vunpack.c.l.b16 %v709
    %v1310 = vunpack.c.h.b16 %v709
    %v1311 = vunpack.c.l.b16 %v710
    %v1312 = vunpack.c.h.b16 %v710
    %v1313 = vunpack.c.l.b16 %v711
    %v1314 = vunpack.c.h.b16 %v711
    %v1315 = vunpack.c.l.b16 %v712
    %v1316 = vunpack.c.h.b16 %v712
    %v1317 = vunpack.c.l.b16 %v713
    %v1318 = vunpack.c.h.b16 %v713
    %v1319 = vunpack.c.l.b16 %v714
    %v1320 = vunpack.c.h.b16 %v714
    %v1321 = vunpack.c.l.b16 %v715
    %v1322 = vunpack.c.h.b16 %v715
    %v1323 = vunpack.c.l.b16 %v716
    %v1324 = vunpack.c.h.b16 %v716
    %v1325 = vunpack.c.l.b16 %v717
    %v1326 = vunpack.c.h.b16 %v717
    %v1327 = vunpack.c.l.b16 %v718
    %v1328 = vunpack.c.h.b16 %v718
    %v1329 = vunpack.c.l.b16 %v719
    %v1330 = vunpack.c.h.b16 %v719
    %v1331 = vunpack.c.l.b16 %v720
    %v1332 = vunpack.c.h.b16 %v720
    %v1333 = vunpack.c.l.b16 %v721
    %v1334 = vunpack.c.h.b16 %v721
    %v1335 = vunpack.c.l.b16 %v722
    %v1336 = vunpack.c.h.b16 %v722
    %v1337 = vunpack.c.l.b16 %v723
    %v1338 = vunpack.c.h.b16 %v723
    %v1339 = vunpack.c.l.b16 %v724
    %v1340 = vunpack.c.h.b16 %v724
    %v1341 = vunpack.c.l.b16 %v725
    %v1342 = vunpack.c.h.b16 %v725
    %v1343 = vunpack.c.l.b16 %v726
    %v1344 = vunpack.c.h.b16 %v726
    %v1345 = vunpack.c.l.b16 %v727
    %v1346 = vunpack.c.h.b16 %v727
    %v1347 = vunpack.c.l.b16 %v728
    %v1348 = vunpack.c.h.b16 %v728
    %v1349 = vunpack.c.l.b16 %v729
    %v1350 = vunpack.c.h.b16 %v729
    %v1351 = vunpack.c.l.b16 %v730
    %v1352 = vunpack.c.h.b16 %v730
    %v1353 = vunpack.c.l.b16 %v731
    %v1354 = vunpack.c.h.b16 %v731
    %v1355 = vunpack.c.l.b16 %v732
    %v1356 = vunpack.c.h.b16 %v732
    %v1357 = vunpack.c.l.b16 %v733
    %v1358 = vunpack.c.h.b16 %v733
    %v1359 = vunpack.c.l.b16 %v734
    %v1360 = vunpack.c.h.b16 %v734
    %v1361 = vunpack.c.l.b16 %v735
    %v1362 = vunpack.c.h.b16 %v735
    %v1363 = vunpack.c.l.b16 %v736
    %v1364 = vunpack.c.h.b16 %v736
    %v1365 = vunpack.c.l.b16 %v737
    %v1366 = vunpack.c.h.b16 %v737
    %v1367 = vpack.c.b16 %v987, %v983
    %v1368 = vpack.c.b16 %v988, %v984
    %v1369 = vpack.c.b16 %v989, %v985
    %v1370 = vpack.c.b16 %v990, %v986
    %v1371 = vpack.c.b16 %v995, %v991
    %v1372 = vpack.c.b16 %v996, %v992
    %v1373 = vpack.c.b16 %v997, %v993
    %v1374 = vpack.c.b16 %v998, %v994
    %v1375 = vpack.c.b16 %v1003, %v999
    %v1376 = vpack.c.b16 %v1004, %v1000
    %v1377 = vpack.c.b16 %v1005, %v1001
    %v1378 = vpack.c.b16 %v1006, %v1002
    %v1379 = vpack.c.b16 %v1011, %v1007
    %v1380 = vpack.c.b16 %v1012, %v1008
    %v1381 = vpack.c.b16 %v1013, %v1009
    %v1382 = vpack.c.b16 %v1014, %v1010
    %v1383 = vpack.c.b16 %v1019, %v1015
    %v1384 = vpack.c.b16 %v1020, %v1016
    %v1385 = vpack.c.b16 %v1021, %v1017
    %v1386 = vpack.c.b16 %v1022, %v1018
    %v1387 = vpack.c.b16 %v1027, %v1023
    %v1388 = vpack.c.b16 %v1028, %v1024
    %v1389 = vpack.c.b16 %v1029, %v1025
    %v1390 = vpack.c.b16 %v1030, %v1026
    %v1391 = vpack.c.b16 %v1035, %v1031
    %v1392 = vpack.c.b16 %v1036, %v1032
    %v1393 = vpack.c.b16 %v1037, %v1033
    %v1394 = vpack.c.b16 %v1038, %v1034
    %v1395 = vpack.c.b16 %v1043, %v1039
    %v1396 = vpack.c.b16 %v1044, %v1040
    %v1397 = vpack.c.b16 %v1045, %v1041
    %v1398 = vpack.c.b16 %v1046, %v1042
    %v1399 = vpack.c.b16 %v1051, %v1047
    %v1400 = vpack.c.b16 %v1052, %v1048
    %v1401 = vpack.c.b16 %v1053, %v1049
    %v1402 = vpack.c.b16 %v1054, %v1050
    %v1403 = vpack.c.b16 %v1059, %v1055
    %v1404 = vpack.c.b16 %v1060, %v1056
    %v1405 = vpack.c.b16 %v1061, %v1057
    %v1406 = vpack.c.b16 %v1062, %v1058
    %v1407 = vpack.c.b16 %v1067, %v1063
    %v1408 = vpack.c.b16 %v1068, %v1064
    %v1409 = vpack.c.b16 %v1069, %v1065
    %v1410 = vpack.c.b16 %v1070, %v1066
    %v1411 = vpack.c.b16 %v1075, %v1071
    %v1412 = vpack.c.b16 %v1076, %v1072
    %v1413 = vpack.c.b16 %v1077, %v1073
    %v1414 = vpack.c.b16 %v1078, %v1074
    %v1415 = vpack.c.b16 %v1083, %v1079
    %v1416 = vpack.c.b16 %v1084, %v1080
    %v1417 = vpack.c.b16 %v1085, %v1081
    %v1418 = vpack.c.b16 %v1086, %v1082
    %v1419 = vpack.c.b16 %v1091, %v1087
    %v1420 = vpack.c.b16 %v1092, %v1088
    %v1421 = vpack.c.b16 %v1093, %v1089
    %v1422 = vpack.c.b16 %v1094, %v1090
    %v1423 = vpack.c.b16 %v1099, %v1095
    %v1424 = vpack.c.b16 %v1100, %v1096
    %v1425 = vpack.c.b16 %v1101, %v1097
    %v1426 = vpack.c.b16 %v1102, %v1098
    %v1427 = vpack.c.b16 %v1107, %v1103
    %v1428 = vpack.c.b16 %v1108, %v1104
    %v1429 = vpack.c.b16 %v1109, %v1105
    %v1430 = vpack.c.b16 %v1110, %v1106
    %v1431 = vpack.c.b16 %v1115, %v1111
    %v1432 = vpack.c.b16 %v1116, %v1112
    %v1433 = vpack.c.b16 %v1117, %v1113
    %v1434 = vpack.c.b16 %v1118, %v1114
    %v1435 = vpack.c.b16 %v1123, %v1119
    %v1436 = vpack.c.b16 %v1124, %v1120
    %v1437 = vpack.c.b16 %v1125, %v1121
    %v1438 = vpack.c.b16 %v1126, %v1122
    %v1439 = vpack.c.b16 %v1131, %v1127
    %v1440 = vpack.c.b16 %v1132, %v1128
    %v1441 = vpack.c.b16 %v1133, %v1129
    %v1442 = vpack.c.b16 %v1134, %v1130
    %v1443 = vpack.c.b16 %v1139, %v1135
    %v1444 = vpack.c.b16 %v1140, %v1136
    %v1445 = vpack.c.b16 %v1141, %v1137
    %v1446 = vpack.c.b16 %v1142, %v1138
    %v1447 = vpack.c.b16 %v1147, %v1143
    %v1448 = vpack.c.b16 %v1148, %v1144
    %v1449 = vpack.c.b16 %v1149, %v1145
    %v1450 = vpack.c.b16 %v1150, %v1146
    %v1451 = vpack.c.b16 %v1155, %v1151
    %v1452 = vpack.c.b16 %v1156, %v1152
    %v1453 = vpack.c.b16 %v1157, %v1153
    %v1454 = vpack.c.b16 %v1158, %v1154
    %v1455 = vpack.c.b16 %v1163, %v1159
    %v1456 = vpack.c.b16 %v1164, %v1160
    %v1457 = vpack.c.b16 %v1165, %v1161
    %v1458 = vpack.c.b16 %v1166, %v1162
    %v1459 = vpack.c.b16 %v1171, %v1167
    %v1460 = vpack.c.b16 %v1172, %v1168
    %v1461 = vpack.c.b16 %v1173, %v1169
    %v1462 = vpack.c.b16 %v1174, %v1170
    %v1463 = vpack.c.b16 %v1179, %v1175
    %v1464 = vpack.c.b16 %v1180, %v1176
    %v1465 = vpack.c.b16 %v1181, %v1177
    %v1466 = vpack.c.b16 %v1182, %v1178
    %v1467 = vpack.c.b16 %v1187, %v1183
    %v1468 = vpack.c.b16 %v1188, %v1184
    %v1469 = vpack.c.b16 %v1189, %v1185
    %v1470 = vpack.c.b16 %v1190, %v1186
    %v1471 = vpack.c.b16 %v1195, %v1191
    %v1472 = vpack.c.b16 %v1196, %v1192
    %v1473 = vpack.c.b16 %v1197, %v1193
    %v1474 = vpack.c.b16 %v1198, %v1194
    %v1475 = vpack.c.b16 %v1203, %v1199
    %v1476 = vpack.c.b16 %v1204, %v1200
    %v1477 = vpack.c.b16 %v1205, %v1201
    %v1478 = vpack.c.b16 %v1206, %v1202
    %v1479 = vpack.c.b16 %v1211, %v1207
    %v1480 = vpack.c.b16 %v1212, %v1208
    %v1481 = vpack.c.b16 %v1213, %v1209
    %v1482 = vpack.c.b16 %v1214, %v1210
    %v1483 = vpack.c.b16 %v1219, %v1215
    %v1484 = vpack.c.b16 %v1220, %v1216
    %v1485 = vpack.c.b16 %v1221, %v1217
    %v1486 = vpack.c.b16 %v1222, %v1218
    %v1487 = vpack.c.b16 %v1227, %v1223
    %v1488 = vpack.c.b16 %v1228, %v1224
    %v1489 = vpack.c.b16 %v1229, %v1225
    %v1490 = vpack.c.b16 %v1230, %v1226
    %v1491 = vpack.c.b16 %v1235, %v1231
    %v1492 = vpack.c.b16 %v1236, %v1232
    %v1493 = vpack.c.b16 %v1237, %v1233
    %v1494 = vpack.c.b16 %v1238, %v1234
    %v1495 = vpack.c.b16 %v1243, %v1239
    %v1496 = vpack.c.b16 %v1244, %v1240
    %v1497 = vpack.c.b16 %v1245, %v1241
    %v1498 = vpack.c.b16 %v1246, %v1242
    %v1499 = vpack.c.b16 %v1251, %v1247
    %v1500 = vpack.c.b16 %v1252, %v1248
    %v1501 = vpack.c.b16 %v1253, %v1249
    %v1502 = vpack.c.b16 %v1254, %v1250
    %v1503 = vpack.c.b16 %v1259, %v1255
    %v1504 = vpack.c.b16 %v1260, %v1256
    %v1505 = vpack.c.b16 %v1261, %v1257
    %v1506 = vpack.c.b16 %v1262, %v1258
    %v1507 = vpack.c.b16 %v1267, %v1263
    %v1508 = vpack.c.b16 %v1268, %v1264
    %v1509 = vpack.c.b16 %v1269, %v1265
    %v1510 = vpack.c.b16 %v1270, %v1266
    %v1511 = vpack.c.b16 %v1275, %v1271
    %v1512 = vpack.c.b16 %v1276, %v1272
    %v1513 = vpack.c.b16 %v1277, %v1273
    %v1514 = vpack.c.b16 %v1278, %v1274
    %v1515 = vpack.c.b16 %v1283, %v1279
    %v1516 = vpack.c.b16 %v1284, %v1280
    %v1517 = vpack.c.b16 %v1285, %v1281
    %v1518 = vpack.c.b16 %v1286, %v1282
    %v1519 = vpack.c.b16 %v1291, %v1287
    %v1520 = vpack.c.b16 %v1292, %v1288
    %v1521 = vpack.c.b16 %v1293, %v1289
    %v1522 = vpack.c.b16 %v1294, %v1290
    %v1523 = vpack.c.b16 %v1299, %v1295
    %v1524 = vpack.c.b16 %v1300, %v1296
    %v1525 = vpack.c.b16 %v1301, %v1297
    %v1526 = vpack.c.b16 %v1302, %v1298
    %v1527 = vpack.c.b16 %v1307, %v1303
    %v1528 = vpack.c.b16 %v1308, %v1304
    %v1529 = vpack.c.b16 %v1309, %v1305
    %v1530 = vpack.c.b16 %v1310, %v1306
    %v1531 = vpack.c.b16 %v1315, %v1311
    %v1532 = vpack.c.b16 %v1316, %v1312
    %v1533 = vpack.c.b16 %v1317, %v1313
    %v1534 = vpack.c.b16 %v1318, %v1314
    %v1535 = vpack.c.b16 %v1323, %v1319
    %v1536 = vpack.c.b16 %v1324, %v1320
    %v1537 = vpack.c.b16 %v1325, %v1321
    %v1538 = vpack.c.b16 %v1326, %v1322
    %v1539 = vpack.c.b16 %v1331, %v1327
    %v1540 = vpack.c.b16 %v1332, %v1328
    %v1541 = vpack.c.b16 %v1333, %v1329
    %v1542 = vpack.c.b16 %v1334, %v1330
    %v1543 = vpack.c.b16 %v1339, %v1335
    %v1544 = vpack.c.b16 %v1340, %v1336
    %v1545 = vpack.c.b16 %v1341, %v1337
    %v1546 = vpack.c.b16 %v1342, %v1338
    %v1547 = vpack.c.b16 %v1347, %v1343
    %v1548 = vpack.c.b16 %v1348, %v1344
    %v1549 = vpack.c.b16 %v1349, %v1345
    %v1550 = vpack.c.b16 %v1350, %v1346
    %v1551 = vpack.c.b16 %v1355, %v1351
    %v1552 = vpack.c.b16 %v1356, %v1352
    %v1553 = vpack.c.b16 %v1357, %v1353
    %v1554 = vpack.c.b16 %v1358, %v1354
    %v1555 = vpack.c.b16 %v1363, %v1359
    %v1556 = vpack.c.b16 %v1364, %v1360
    %v1557 = vpack.c.b16 %v1365, %v1361
    %v1558 = vpack.c.b16 %v1366, %v1362
    %1751 = vmatpush.bf16.msra.mxu0 %v1395
    %1752 = vmatpush.bf16.msra.mxu0 %v1391
    %1753 = vmatpush.bf16.msra.mxu0 %v1387
    %1754 = vmatpush.bf16.msra.mxu0 %v1383
    %1755 = vmatpush.bf16.msra.mxu0 %v1379
    %1756 = vmatpush.bf16.msra.mxu0 %v1375
    %1757 = vmatpush.bf16.msra.mxu0 %v1371
    %1758 = vmatpush.bf16.msra.mxu0 %v1367
    %1759 = vmatmul.bf16.gmra.mxu0 %v779
    %v1760 = vpop.f32.mrf.mxu0
    %v1761 = vadd.f32 %v740, %v1760
    %v1762 = vpop.f32.mrf.mxu0
    %1763 = vdwg.mxu0
    %1764 = vmatpush.bf16.msra.mxu0 %v1427
    %1765 = vmatpush.bf16.msra.mxu0 %v1423
    %1766 = vmatpush.bf16.msra.mxu0 %v1419
    %1767 = vmatpush.bf16.msra.mxu0 %v1415
    %1768 = vmatpush.bf16.msra.mxu0 %v1411
    %1769 = vmatpush.bf16.msra.mxu0 %v1407
    %1770 = vmatpush.bf16.msra.mxu0 %v1403
    %1771 = vmatpush.bf16.msra.mxu0 %v1399
    %1772 = vmatmul.bf16.gmra.mxu0 %v780
    %v1773 = vpop.f32.mrf.mxu0
    %v1774 = vadd.f32 %v1761, %v1773
    %v1775 = vpop.f32.mrf.mxu0
    %1776 = vdwg.mxu0
    %1777 = vmatpush.bf16.msra.mxu0 %v1459
    %1778 = vmatpush.bf16.msra.mxu0 %v1455
    %1779 = vmatpush.bf16.msra.mxu0 %v1451
    %1780 = vmatpush.bf16.msra.mxu0 %v1447
    %1781 = vmatpush.bf16.msra.mxu0 %v1443
    %1782 = vmatpush.bf16.msra.mxu0 %v1439
    %1783 = vmatpush.bf16.msra.mxu0 %v1435
    %1784 = vmatpush.bf16.msra.mxu0 %v1431
    %1785 = vmatmul.bf16.gmra.mxu0 %v781
    %v1786 = vpop.f32.mrf.mxu0
    %v1787 = vadd.f32 %v1774, %v1786
    %v1788 = vpop.f32.mrf.mxu0
    %1789 = vdwg.mxu0
    %1790 = vmatpush.bf16.msra.mxu0 %v1491
    %1791 = vmatpush.bf16.msra.mxu0 %v1487
    %1792 = vmatpush.bf16.msra.mxu0 %v1483
    %1793 = vmatpush.bf16.msra.mxu0 %v1479
    %1794 = vmatpush.bf16.msra.mxu0 %v1475
    %1795 = vmatpush.bf16.msra.mxu0 %v1471
    %1796 = vmatpush.bf16.msra.mxu0 %v1467
    %1797 = vmatpush.bf16.msra.mxu0 %v1463
    %1798 = vmatmul.bf16.gmra.mxu0 %v782
    %v1799 = vpop.f32.mrf.mxu0
    %v1800 = vadd.f32 %v1787, %v1799
    %v1801 = vpop.f32.mrf.mxu0
    %1802 = vdwg.mxu0
    %1803 = vmatpush.bf16.msra.mxu0 %v1523
    %1804 = vmatpush.bf16.msra.mxu0 %v1519
    %1805 = vmatpush.bf16.msra.mxu0 %v1515
    %1806 = vmatpush.bf16.msra.mxu0 %v1511
    %1807 = vmatpush.bf16.msra.mxu0 %v1507
    %1808 = vmatpush.bf16.msra.mxu0 %v1503
    %1809 = vmatpush.bf16.msra.mxu0 %v1499
    %1810 = vmatpush.bf16.msra.mxu0 %v1495
    %1811 = vmatmul.bf16.gmra.mxu0 %v783
    %v1812 = vpop.f32.mrf.mxu0
    %v1813 = vadd.f32 %v1800, %v1812
    %v1814 = vpop.f32.mrf.mxu0
    %1815 = vdwg.mxu0
    %1816 = vmatpush.bf16.msra.mxu0 %v1555
    %1817 = vmatpush.bf16.msra.mxu0 %v1551
    %1818 = vmatpush.bf16.msra.mxu0 %v1547
    %1819 = vmatpush.bf16.msra.mxu0 %v1543
    %1820 = vmatpush.bf16.msra.mxu0 %v1539
    %1821 = vmatpush.bf16.msra.mxu0 %v1535
    %1822 = vmatpush.bf16.msra.mxu0 %v1531
    %1823 = vmatpush.bf16.msra.mxu0 %v1527
    %1824 = vmatmul.bf16.gmra.mxu0 %v784
    %v1825 = vpop.f32.mrf.mxu0
    %v1826 = vadd.f32 %v1813, %v1825
    %v1827 = vpop.f32.mrf.mxu0
    %1828 = vdwg.mxu0
    %1829 = vmatpush.bf16.msra.mxu0 %v1396
    %1830 = vmatpush.bf16.msra.mxu0 %v1392
    %1831 = vmatpush.bf16.msra.mxu0 %v1388
    %1832 = vmatpush.bf16.msra.mxu0 %v1384
    %1833 = vmatpush.bf16.msra.mxu0 %v1380
    %1834 = vmatpush.bf16.msra.mxu0 %v1376
    %1835 = vmatpush.bf16.msra.mxu0 %v1372
    %1836 = vmatpush.bf16.msra.mxu0 %v1368
    %1837 = vmatmul.bf16.gmra.mxu0 %v779
    %v1838 = vpop.f32.mrf.mxu0
    %v1839 = vadd.f32 %v741, %v1838
    %v1840 = vpop.f32.mrf.mxu0
    %1841 = vdwg.mxu0
    %1842 = vmatpush.bf16.msra.mxu0 %v1428
    %1843 = vmatpush.bf16.msra.mxu0 %v1424
    %1844 = vmatpush.bf16.msra.mxu0 %v1420
    %1845 = vmatpush.bf16.msra.mxu0 %v1416
    %1846 = vmatpush.bf16.msra.mxu0 %v1412
    %1847 = vmatpush.bf16.msra.mxu0 %v1408
    %1848 = vmatpush.bf16.msra.mxu0 %v1404
    %1849 = vmatpush.bf16.msra.mxu0 %v1400
    %1850 = vmatmul.bf16.gmra.mxu0 %v780
    %v1851 = vpop.f32.mrf.mxu0
    %v1852 = vadd.f32 %v1839, %v1851
    %v1853 = vpop.f32.mrf.mxu0
    %1854 = vdwg.mxu0
    %1855 = vmatpush.bf16.msra.mxu0 %v1460
    %1856 = vmatpush.bf16.msra.mxu0 %v1456
    %1857 = vmatpush.bf16.msra.mxu0 %v1452
    %1858 = vmatpush.bf16.msra.mxu0 %v1448
    %1859 = vmatpush.bf16.msra.mxu0 %v1444
    %1860 = vmatpush.bf16.msra.mxu0 %v1440
    %1861 = vmatpush.bf16.msra.mxu0 %v1436
    %1862 = vmatpush.bf16.msra.mxu0 %v1432
    %1863 = vmatmul.bf16.gmra.mxu0 %v781
    %v1864 = vpop.f32.mrf.mxu0
    %v1865 = vadd.f32 %v1852, %v1864
    %v1866 = vpop.f32.mrf.mxu0
    %1867 = vdwg.mxu0
    %1868 = vmatpush.bf16.msra.mxu0 %v1492
    %1869 = vmatpush.bf16.msra.mxu0 %v1488
    %1870 = vmatpush.bf16.msra.mxu0 %v1484
    %1871 = vmatpush.bf16.msra.mxu0 %v1480
    %1872 = vmatpush.bf16.msra.mxu0 %v1476
    %1873 = vmatpush.bf16.msra.mxu0 %v1472
    %1874 = vmatpush.bf16.msra.mxu0 %v1468
    %1875 = vmatpush.bf16.msra.mxu0 %v1464
    %1876 = vmatmul.bf16.gmra.mxu0 %v782
    %v1877 = vpop.f32.mrf.mxu0
    %v1878 = vadd.f32 %v1865, %v1877
    %v1879 = vpop.f32.mrf.mxu0
    %1880 = vdwg.mxu0
    %1881 = vmatpush.bf16.msra.mxu0 %v1524
    %1882 = vmatpush.bf16.msra.mxu0 %v1520
    %1883 = vmatpush.bf16.msra.mxu0 %v1516
    %1884 = vmatpush.bf16.msra.mxu0 %v1512
    %1885 = vmatpush.bf16.msra.mxu0 %v1508
    %1886 = vmatpush.bf16.msra.mxu0 %v1504
    %1887 = vmatpush.bf16.msra.mxu0 %v1500
    %1888 = vmatpush.bf16.msra.mxu0 %v1496
    %1889 = vmatmul.bf16.gmra.mxu0 %v783
    %v1890 = vpop.f32.mrf.mxu0
    %v1891 = vadd.f32 %v1878, %v1890
    %v1892 = vpop.f32.mrf.mxu0
    %1893 = vdwg.mxu0
    %1894 = vmatpush.bf16.msra.mxu0 %v1556
    %1895 = vmatpush.bf16.msra.mxu0 %v1552
    %1896 = vmatpush.bf16.msra.mxu0 %v1548
    %1897 = vmatpush.bf16.msra.mxu0 %v1544
    %1898 = vmatpush.bf16.msra.mxu0 %v1540
    %1899 = vmatpush.bf16.msra.mxu0 %v1536
    %1900 = vmatpush.bf16.msra.mxu0 %v1532
    %1901 = vmatpush.bf16.msra.mxu0 %v1528
    %1902 = vmatmul.bf16.gmra.mxu0 %v784
    %v1903 = vpop.f32.mrf.mxu0
    %v1904 = vadd.f32 %v1891, %v1903
    %v1905 = vpop.f32.mrf.mxu0
    %1906 = vdwg.mxu0
    %1907 = vmatpush.bf16.msra.mxu0 %v1397
    %1908 = vmatpush.bf16.msra.mxu0 %v1393
    %1909 = vmatpush.bf16.msra.mxu0 %v1389
    %1910 = vmatpush.bf16.msra.mxu0 %v1385
    %1911 = vmatpush.bf16.msra.mxu0 %v1381
    %1912 = vmatpush.bf16.msra.mxu0 %v1377
    %1913 = vmatpush.bf16.msra.mxu0 %v1373
    %1914 = vmatpush.bf16.msra.mxu0 %v1369
    %1915 = vmatmul.bf16.gmra.mxu0 %v779
    %v1916 = vpop.f32.mrf.mxu0
    %v1917 = vadd.f32 %v742, %v1916
    %v1918 = vpop.f32.mrf.mxu0
    %1919 = vdwg.mxu0
    %1920 = vmatpush.bf16.msra.mxu0 %v1429
    %1921 = vmatpush.bf16.msra.mxu0 %v1425
    %1922 = vmatpush.bf16.msra.mxu0 %v1421
    %1923 = vmatpush.bf16.msra.mxu0 %v1417
    %1924 = vmatpush.bf16.msra.mxu0 %v1413
    %1925 = vmatpush.bf16.msra.mxu0 %v1409
    %1926 = vmatpush.bf16.msra.mxu0 %v1405
    %1927 = vmatpush.bf16.msra.mxu0 %v1401
    %1928 = vmatmul.bf16.gmra.mxu0 %v780
    %v1929 = vpop.f32.mrf.mxu0
    %v1930 = vadd.f32 %v1917, %v1929
    %v1931 = vpop.f32.mrf.mxu0
    %1932 = vdwg.mxu0
    %1933 = vmatpush.bf16.msra.mxu0 %v1461
    %1934 = vmatpush.bf16.msra.mxu0 %v1457
    %1935 = vmatpush.bf16.msra.mxu0 %v1453
    %1936 = vmatpush.bf16.msra.mxu0 %v1449
    %1937 = vmatpush.bf16.msra.mxu0 %v1445
    %1938 = vmatpush.bf16.msra.mxu0 %v1441
    %1939 = vmatpush.bf16.msra.mxu0 %v1437
    %1940 = vmatpush.bf16.msra.mxu0 %v1433
    %1941 = vmatmul.bf16.gmra.mxu0 %v781
    %v1942 = vpop.f32.mrf.mxu0
    %v1943 = vadd.f32 %v1930, %v1942
    %v1944 = vpop.f32.mrf.mxu0
    %1945 = vdwg.mxu0
    %1946 = vmatpush.bf16.msra.mxu0 %v1493
    %1947 = vmatpush.bf16.msra.mxu0 %v1489
    %1948 = vmatpush.bf16.msra.mxu0 %v1485
    %1949 = vmatpush.bf16.msra.mxu0 %v1481
    %1950 = vmatpush.bf16.msra.mxu0 %v1477
    %1951 = vmatpush.bf16.msra.mxu0 %v1473
    %1952 = vmatpush.bf16.msra.mxu0 %v1469
    %1953 = vmatpush.bf16.msra.mxu0 %v1465
    %1954 = vmatmul.bf16.gmra.mxu0 %v782
    %v1955 = vpop.f32.mrf.mxu0
    %v1956 = vadd.f32 %v1943, %v1955
    %v1957 = vpop.f32.mrf.mxu0
    %1958 = vdwg.mxu0
    %1959 = vmatpush.bf16.msra.mxu0 %v1525
    %1960 = vmatpush.bf16.msra.mxu0 %v1521
    %1961 = vmatpush.bf16.msra.mxu0 %v1517
    %1962 = vmatpush.bf16.msra.mxu0 %v1513
    %1963 = vmatpush.bf16.msra.mxu0 %v1509
    %1964 = vmatpush.bf16.msra.mxu0 %v1505
    %1965 = vmatpush.bf16.msra.mxu0 %v1501
    %1966 = vmatpush.bf16.msra.mxu0 %v1497
    %1967 = vmatmul.bf16.gmra.mxu0 %v783
    %v1968 = vpop.f32.mrf.mxu0
    %v1969 = vadd.f32 %v1956, %v1968
    %v1970 = vpop.f32.mrf.mxu0
    %1971 = vdwg.mxu0
    %1972 = vmatpush.bf16.msra.mxu0 %v1557
    %1973 = vmatpush.bf16.msra.mxu0 %v1553
    %1974 = vmatpush.bf16.msra.mxu0 %v1549
    %1975 = vmatpush.bf16.msra.mxu0 %v1545
    %1976 = vmatpush.bf16.msra.mxu0 %v1541
    %1977 = vmatpush.bf16.msra.mxu0 %v1537
    %1978 = vmatpush.bf16.msra.mxu0 %v1533
    %1979 = vmatpush.bf16.msra.mxu0 %v1529
    %1980 = vmatmul.bf16.gmra.mxu0 %v784
    %v1981 = vpop.f32.mrf.mxu0
    %v1982 = vadd.f32 %v1969, %v1981
    %v1983 = vpop.f32.mrf.mxu0
    %1984 = vdwg.mxu0
    %1985 = vmatpush.bf16.msra.mxu0 %v1398
    %1986 = vmatpush.bf16.msra.mxu0 %v1394
    %1987 = vmatpush.bf16.msra.mxu0 %v1390
    %1988 = vmatpush.bf16.msra.mxu0 %v1386
    %1989 = vmatpush.bf16.msra.mxu0 %v1382
    %1990 = vmatpush.bf16.msra.mxu0 %v1378
    %1991 = vmatpush.bf16.msra.mxu0 %v1374
    %1992 = vmatpush.bf16.msra.mxu0 %v1370
    %1993 = vmatmul.bf16.gmra.mxu0 %v779
    %v1994 = vpop.f32.mrf.mxu0
    %v1995 = vadd.f32 %v743, %v1994
    %v1996 = vpop.f32.mrf.mxu0
    %1997 = vdwg.mxu0
    %1998 = vmatpush.bf16.msra.mxu0 %v1430
    %1999 = vmatpush.bf16.msra.mxu0 %v1426
    %2000 = vmatpush.bf16.msra.mxu0 %v1422
    %2001 = vmatpush.bf16.msra.mxu0 %v1418
    %2002 = vmatpush.bf16.msra.mxu0 %v1414
    %2003 = vmatpush.bf16.msra.mxu0 %v1410
    %2004 = vmatpush.bf16.msra.mxu0 %v1406
    %2005 = vmatpush.bf16.msra.mxu0 %v1402
    %2006 = vmatmul.bf16.gmra.mxu0 %v780
    %v2007 = vpop.f32.mrf.mxu0
    %v2008 = vadd.f32 %v1995, %v2007
    %v2009 = vpop.f32.mrf.mxu0
    %2010 = vdwg.mxu0
    %2011 = vmatpush.bf16.msra.mxu0 %v1462
    %2012 = vmatpush.bf16.msra.mxu0 %v1458
    %2013 = vmatpush.bf16.msra.mxu0 %v1454
    %2014 = vmatpush.bf16.msra.mxu0 %v1450
    %2015 = vmatpush.bf16.msra.mxu0 %v1446
    %2016 = vmatpush.bf16.msra.mxu0 %v1442
    %2017 = vmatpush.bf16.msra.mxu0 %v1438
    %2018 = vmatpush.bf16.msra.mxu0 %v1434
    %2019 = vmatmul.bf16.gmra.mxu0 %v781
    %v2020 = vpop.f32.mrf.mxu0
    %v2021 = vadd.f32 %v2008, %v2020
    %v2022 = vpop.f32.mrf.mxu0
    %2023 = vdwg.mxu0
    %2024 = vmatpush.bf16.msra.mxu0 %v1494
    %2025 = vmatpush.bf16.msra.mxu0 %v1490
    %2026 = vmatpush.bf16.msra.mxu0 %v1486
    %2027 = vmatpush.bf16.msra.mxu0 %v1482
    %2028 = vmatpush.bf16.msra.mxu0 %v1478
    %2029 = vmatpush.bf16.msra.mxu0 %v1474
    %2030 = vmatpush.bf16.msra.mxu0 %v1470
    %2031 = vmatpush.bf16.msra.mxu0 %v1466
    %2032 = vmatmul.bf16.gmra.mxu0 %v782
    %v2033 = vpop.f32.mrf.mxu0
    %v2034 = vadd.f32 %v2021, %v2033
    %v2035 = vpop.f32.mrf.mxu0
    %2036 = vdwg.mxu0
    %2037 = vmatpush.bf16.msra.mxu0 %v1526
    %2038 = vmatpush.bf16.msra.mxu0 %v1522
    %2039 = vmatpush.bf16.msra.mxu0 %v1518
    %2040 = vmatpush.bf16.msra.mxu0 %v1514
    %2041 = vmatpush.bf16.msra.mxu0 %v1510
    %2042 = vmatpush.bf16.msra.mxu0 %v1506
    %2043 = vmatpush.bf16.msra.mxu0 %v1502
    %2044 = vmatpush.bf16.msra.mxu0 %v1498
    %2045 = vmatmul.bf16.gmra.mxu0 %v783
    %v2046 = vpop.f32.mrf.mxu0
    %v2047 = vadd.f32 %v2034, %v2046
    %v2048 = vpop.f32.mrf.mxu0
    %2049 = vdwg.mxu0
    %2050 = vmatpush.bf16.msra.mxu0 %v1558
    %2051 = vmatpush.bf16.msra.mxu0 %v1554
    %2052 = vmatpush.bf16.msra.mxu0 %v1550
    %2053 = vmatpush.bf16.msra.mxu0 %v1546
    %2054 = vmatpush.bf16.msra.mxu0 %v1542
    %2055 = vmatpush.bf16.msra.mxu0 %v1538
    %2056 = vmatpush.bf16.msra.mxu0 %v1534
    %2057 = vmatpush.bf16.msra.mxu0 %v1530
    %2058 = vmatmul.bf16.gmra.mxu0 %v784
    %v2059 = vpop.f32.mrf.mxu0
    %v2060 = vadd.f32 %v2047, %v2059
    %v2061 = vpop.f32.mrf.mxu0
    %2062 = vdwg.mxu0
    %v2067 = vrot.slane %v1904, 6
    %v2068 = vrot.slane %v1982, 4
    %v2069 = vrot.slane %v2060, 2
    %vm2070 = vcmask 1041408
    %v2071 = vsel %vm2070, %v1826, %v2067
    %vm2072 = vcmask 1045508
    %v2073 = vsel %vm2072, %v2068, %v2069
    %v2074 = vsel %vm266, %v2071, %v2073
    %2076 = vst [vmem:[#allocation5] sm:$0xff] %v2074
    // Predicated region
    $region18: #{_lambda_.3} parent=1 // pred_check
      _
    $region19: #{_lambda_.3} parent=1 // pred_check_branch
      %2078 = sbr.rel (0) target = $region21
    $region20: #{_lambda_.3} parent=1 // pred_region
      %2080 = vsyncadd [#allocation4], 0
      %s2082 = sshll.u32 [#allocation5], 4
      %s2083 = int_to_ptr.vmem [resolvable:$true] %s2082
      %s2084 = sshll.u32 %s3, 4
      %s2085 = int_to_ptr.hbm [resolvable:$true] %s2084
      %2087 = dma.vmem_to_hbm [thread:$0]  %s2083, 128, %s2085, [#allocation4]
    $region21: #{_lambda_.3} parent=1 // pred_fallthru
      _
    // Predicated region
    $region22: #{_lambda_.3} parent=1 // pred_check
      _
    $region23: #{_lambda_.3} parent=1 // pred_check_branch
      %2089 = sbr.rel (0) target = $region25
    $region24: #{_lambda_.3} parent=1 // pred_region
      %2091 = dma.done [#allocation4], 128
    $region25: #{_lambda_.3} parent=1 // pred_fallthru
      _
    %2092 = vsyncpa [#allocation3], 1
    %2093 = vsyncpa [#allocation4], 1

</llo_original>
